<compile_context>
chip_gen: v5e
topology: v5e:2x2
jax: 0.10.0
libtpu: 0.0.40
codegen_flags: <defaults>
</compile_context>

<pallas_src>
import functools

import jax
import jax.numpy as jnp
from jax import lax
from jax.experimental import pallas as pl
from jax.experimental.pallas import tpu as pltpu

LANE = 128


# ------------------------------ Fused kernel --------------------------------

def _vit_fused_kernel(patches_ref, enc_w_ref, enc_b_ref, pos_ref,
                      ln1g_ref, ln1b_ref, wqkv_ref, bqkv_ref, wo_ref, bo_ref,
                      ln2g_ref, ln2b_ref, w1_ref, b1_ref, w2_ref, b2_ref,
                      dec_w_ref, dec_b_ref,
                      out_ref, x_sc, attn_sc, *, num_heads):
    """Fused ViT: encode (l==0) -> transformer layer l -> decode (l==L-1).

    Grid is (batch, layer).  The residual stream for the current batch
    element lives in `x_sc` (VMEM) across the whole layer axis.
    """
    f32, bf16 = jnp.float32, jnp.bfloat16
    l = pl.program_id(1)
    num_l = pl.num_programs(1)

    # ---- encode: patch embedding + learned positional encoding ------------
    @pl.when(l == 0)
    def _():
        xp = patches_ref[0].astype(bf16)                         # (S, F_in)
        t = jnp.dot(xp, enc_w_ref[...], preferred_element_type=f32)
        x_sc[...] = t + enc_b_ref[...] + pos_ref[...]

    # ---- one pre-norm transformer layer (weights streamed per grid step) --
    x = x_sc[...]                                                # (S, D) f32
    S, D = x.shape
    H = num_heads
    Dh = D // H
    scale = 1.0 / (Dh ** 0.5)

    def layer_norm(v, g, b):
        mu = jnp.mean(v, axis=-1, keepdims=True)
        var = jnp.mean(jnp.square(v - mu), axis=-1, keepdims=True)
        return (v - mu) * lax.rsqrt(var + 1e-5) * g + b

    # multi-head self-attention, single wide fused QKV matmul
    xn = layer_norm(x, ln1g_ref[0], ln1b_ref[0])
    qkv = jnp.dot(xn.astype(bf16), wqkv_ref[0],
                  preferred_element_type=f32) + bqkv_ref[0]      # (S, 3D)
    qkv_b = qkv.astype(bf16)
    for h in range(H):
        lo = h * Dh
        # TODO(synk): 32-lane value slices cost XLU shuffles; a head-major
        # (3H, S, Dh) QKV scratch would make these leading-dim indexes.
        qh = qkv_b[:, lo:lo + Dh]                                # (S, Dh)
        kh = qkv_b[:, D + lo:D + lo + Dh]
        vh = qkv_b[:, 2 * D + lo:2 * D + lo + Dh]
        s = lax.dot_general(qh, kh, (((1,), (1,)), ((), ())),
                            preferred_element_type=f32) * scale   # (S, S)
        s = s - jnp.max(s, axis=-1, keepdims=True)
        p = jnp.exp(s)
        # EUP approx reciprocal: ~2^-12 rel. error vs. an exact softmax divide.
        p = p * pl.reciprocal(jnp.sum(p, axis=-1, keepdims=True), approx=True)
        attn_sc[:, lo:lo + Dh] = jnp.dot(p.astype(bf16), vh,
                                         preferred_element_type=f32)
    # heads gathered in attn_sc -> ONE wide (S,D)x(D,D) output projection
    attn = jnp.dot(attn_sc[...].astype(bf16), wo_ref[0],
                   preferred_element_type=f32) + bo_ref[0]
    x = x + attn                                                 # residual

    # MLP (pre-norm) with fused tanh GELU
    xn = layer_norm(x, ln2g_ref[0], ln2b_ref[0])
    hdn = jnp.dot(xn.astype(bf16), w1_ref[0],
                  preferred_element_type=f32) + b1_ref[0]
    hdn = jax.nn.gelu(hdn, approximate=True)
    x = x + jnp.dot(hdn.astype(bf16), w2_ref[0],
                    preferred_element_type=f32) + b2_ref[0]      # residual
    x_sc[...] = x

    # ---- decode: linear to (zero-padded, lane-dense) patch features -------
    @pl.when(l == num_l - 1)
    def _():
        y = jnp.dot(x.astype(bf16), dec_w_ref[...],
                    preferred_element_type=f32) + dec_b_ref[...]  # (S, Fo_pad)
        out_ref[0] = y


# ------------------------------ Kernel wrapper ------------------------------

_LAYER_PARAM_NAMES = ("ln1_g", "ln1_b", "wqkv", "bqkv", "wo", "bo",
                      "ln2_g", "ln2_b", "w1", "b1", "w2", "b2")


def vit_fused(patches, params, *, num_heads):
    """patches: (B, S, F_in) -> (B, S, Fo_pad), one pallas_call for the net."""
    B, S, F_in = patches.shape
    D = params["enc_w"].shape[1]
    L = params["wqkv"].shape[0]
    Fo_pad = params["dec_w"].shape[1]
    pos = params["pos"][0, :S, :]                                # (S, D)

    def const_spec(a):                    # same block at every grid step
        return pl.BlockSpec(a.shape, lambda b, l, z=(0,) * a.ndim: z)

    def layer_spec(a):                    # streamed along the layer axis
        blk = (1,) + a.shape[1:]
        return pl.BlockSpec(blk, lambda b, l, z=(0,) * (a.ndim - 1): (l,) + z,
                            pipeline_mode=pl.Buffered(2))

    # NOTE: constants (enc/dec/pos) could use pl.Buffered(1) to halve their
    # VMEM footprint when scaling; irrelevant at this size so left default.
    in_specs = ([pl.BlockSpec((1, S, F_in), lambda b, l: (b, 0, 0)),
                 const_spec(params["enc_w"]), const_spec(params["enc_b"]),
                 const_spec(pos)]
                + [layer_spec(params[n]) for n in _LAYER_PARAM_NAMES]
                + [const_spec(params["dec_w"]), const_spec(params["dec_b"])])

    return pl.pallas_call(
        functools.partial(_vit_fused_kernel, num_heads=num_heads),
        out_shape=jax.ShapeDtypeStruct((B, S, Fo_pad), jnp.float32),
        grid=(B, L),
        in_specs=in_specs,
        out_specs=pl.BlockSpec((1, S, Fo_pad), lambda b, l: (b, 0, 0)),
        scratch_shapes=[pltpu.VMEM((S, D), jnp.float32),   # residual stream
                        pltpu.VMEM((S, D), jnp.float32)],  # per-head PV gather
        compiler_params=pltpu.CompilerParams(
            dimension_semantics=("parallel", "arbitrary")),
    )(patches, params["enc_w"], params["enc_b"], pos,
      *[params[n] for n in _LAYER_PARAM_NAMES],
      params["dec_w"], params["dec_b"])


# ------------------------------- Model glue ---------------------------------

def init_vit_params(key, in_channels, out_channels, patch_dim, num_layers,
                    num_heads, embedding_dim, hidden_dim, max_len):
    f_in = patch_dim * patch_dim * in_channels
    f_out = patch_dim * patch_dim * out_channels
    f_out_pad = ((f_out + LANE - 1) // LANE) * LANE
    D, Hd, L = embedding_dim, hidden_dim, num_layers
    k = jax.random.split(key, 7)

    def w(kk, shape):
        # bf16 weight storage: native MXU input dtype, half the HBM/VMEM bytes.
        return (jax.random.normal(kk, shape, jnp.float32) * 0.02).astype(
            jnp.bfloat16)

    # decode weight/bias zero-padded to a 128-lane multiple -> unmasked stores
    dec_w = jnp.zeros((D, f_out_pad), jnp.bfloat16)
    dec_w = dec_w.at[:, :f_out].set(w(k[1], (D, f_out)))

    return {
        "enc_w": w(k[0], (f_in, D)),
        "enc_b": jnp.zeros((1, D), jnp.float32),
        "dec_w": dec_w,
        "dec_b": jnp.zeros((1, f_out_pad), jnp.float32),
        "pos": jax.random.normal(k[2], (1, max_len, D), jnp.float32) * 0.02,
        # per-layer params stacked on a leading L axis (streamed by the layer
        # grid axis of the fused kernel)
        "ln1_g": jnp.ones((L, 1, D), jnp.float32),
        "ln1_b": jnp.zeros((L, 1, D), jnp.float32),
        "ln2_g": jnp.ones((L, 1, D), jnp.float32),
        "ln2_b": jnp.zeros((L, 1, D), jnp.float32),
        "wqkv": w(k[3], (L, D, 3 * D)),          # fused [Wq | Wk | Wv]
        "bqkv": jnp.zeros((L, 1, 3 * D), jnp.float32),
        "wo": w(k[4], (L, D, D)),
        "bo": jnp.zeros((L, 1, D), jnp.float32),
        "w1": w(k[5], (L, D, Hd)),
        "b1": jnp.zeros((L, 1, Hd), jnp.float32),
        "w2": w(k[6], (L, Hd, D)),
        "b2": jnp.zeros((L, 1, D), jnp.float32),
    }


def vit_forward(params, x, *, patch_dim, num_heads, out_channels):
    b, c, hh, ww = x.shape
    p = patch_dim
    h, w = hh // p, ww // p
    S = h * w
    f_out = p * p * out_channels

    # TODO(synk): patchify/unpatchify stay as XLA layout copies (pure data
    # movement); they could be folded into the kernel index_maps at scale.
    # rearrange 'b c (h p1) (w p2) -> b (h w) (p1 p2 c)'
    xp = (x.reshape(b, c, h, p, w, p)
           .transpose(0, 2, 4, 3, 5, 1)
           .reshape(b, S, p * p * c))

    out = vit_fused(xp, params, num_heads=num_heads)             # (b,S,Fo_pad)
    out = out[:, :, :f_out]                                      # drop lane pad

    # rearrange 'b (l1 l2) (p1 p2 d) -> b d (l1 p1) (l2 p2)'
    y = (out.reshape(b, h, w, p, p, out_channels)
            .transpose(0, 5, 1, 3, 2, 4)
            .reshape(b, out_channels, h * p, w * p))
    return y


# ---------------------------------- Main -------------------------------------

if __name__ == "__main__":
    # small config consistent with the module's forward
    in_channels = 4
    out_channels = 4
    patch_dim = 4
    num_layers = 2
    num_heads = 4
    embedding_dim = 128
    hidden_dim = 256
    max_len = 64

    key = jax.random.PRNGKey(0)
    kx, kp = jax.random.split(key)
    x = jax.random.normal(kx, (2, in_channels, 16, 16), dtype=jnp.float32)
    params = init_vit_params(kp, in_channels, out_channels, patch_dim,
                             num_layers, num_heads, embedding_dim,
                             hidden_dim, max_len)

    fwd = jax.jit(functools.partial(vit_forward, patch_dim=patch_dim,
                                    num_heads=num_heads,
                                    out_channels=out_channels))
    y = fwd(params, x)
    y = jax.block_until_ready(y)
    assert y.shape == (2, out_channels, 16, 16), y.shape
    assert y.dtype == jnp.float32
    print("KERNEL_OK")
</pallas_src>

<mosaic_0001>
module attributes {stable_mosaic.version = 11 : i64} {
  func.func @_vit_fused_kernel(%arg0: i32, %arg1: i32, %arg2: memref<1x16x64xf32, #tpu.memory_space<vmem>>, %arg3: memref<64x128xbf16, #tpu.memory_space<vmem>>, %arg4: memref<1x128xf32, #tpu.memory_space<vmem>>, %arg5: memref<16x128xf32, #tpu.memory_space<vmem>>, %arg6: memref<1x1x128xf32, #tpu.memory_space<vmem>>, %arg7: memref<1x1x128xf32, #tpu.memory_space<vmem>>, %arg8: memref<1x128x384xbf16, #tpu.memory_space<vmem>>, %arg9: memref<1x1x384xf32, #tpu.memory_space<vmem>>, %arg10: memref<1x128x128xbf16, #tpu.memory_space<vmem>>, %arg11: memref<1x1x128xf32, #tpu.memory_space<vmem>>, %arg12: memref<1x1x128xf32, #tpu.memory_space<vmem>>, %arg13: memref<1x1x128xf32, #tpu.memory_space<vmem>>, %arg14: memref<1x128x256xbf16, #tpu.memory_space<vmem>>, %arg15: memref<1x1x256xf32, #tpu.memory_space<vmem>>, %arg16: memref<1x256x128xbf16, #tpu.memory_space<vmem>>, %arg17: memref<1x1x128xf32, #tpu.memory_space<vmem>>, %arg18: memref<128x128xbf16, #tpu.memory_space<vmem>>, %arg19: memref<1x128xf32, #tpu.memory_space<vmem>>, %arg20: memref<1x16x128xf32, #tpu.memory_space<vmem>>, %arg21: memref<16x128xf32, #tpu.memory_space<vmem>>, %arg22: memref<16x128xf32, #tpu.memory_space<vmem>>) attributes {dimension_semantics = [#tpu.dimension_semantics<parallel>, #tpu.dimension_semantics<arbitrary>], iteration_bounds = array<i64: 2, 2>, scalar_prefetch = 0 : i64, scratch_operands = 2 : i64, tpu.core_type = #tpu.core_type<tc>, window_params = [{transform_indices = @transform_0, window_bounds = array<i64: 1, 16, 64>}, {pipeline_mode = #tpu.pipeline_mode<synchronous>, transform_indices = @transform_1, window_bounds = array<i64: 64, 128>}, {pipeline_mode = #tpu.pipeline_mode<synchronous>, transform_indices = @transform_2, window_bounds = array<i64: 1, 128>}, {pipeline_mode = #tpu.pipeline_mode<synchronous>, transform_indices = @transform_3, window_bounds = array<i64: 16, 128>}, {pipeline_mode = #tpu.pipeline_mode<double_buffered>, transform_indices = @transform_4, window_bounds = array<i64: 1, 1, 128>}, {pipeline_mode = #tpu.pipeline_mode<double_buffered>, transform_indices = @transform_5, window_bounds = array<i64: 1, 1, 128>}, {pipeline_mode = #tpu.pipeline_mode<double_buffered>, transform_indices = @transform_6, window_bounds = array<i64: 1, 128, 384>}, {pipeline_mode = #tpu.pipeline_mode<double_buffered>, transform_indices = @transform_7, window_bounds = array<i64: 1, 1, 384>}, {pipeline_mode = #tpu.pipeline_mode<double_buffered>, transform_indices = @transform_8, window_bounds = array<i64: 1, 128, 128>}, {pipeline_mode = #tpu.pipeline_mode<double_buffered>, transform_indices = @transform_9, window_bounds = array<i64: 1, 1, 128>}, {pipeline_mode = #tpu.pipeline_mode<double_buffered>, transform_indices = @transform_10, window_bounds = array<i64: 1, 1, 128>}, {pipeline_mode = #tpu.pipeline_mode<double_buffered>, transform_indices = @transform_11, window_bounds = array<i64: 1, 1, 128>}, {pipeline_mode = #tpu.pipeline_mode<double_buffered>, transform_indices = @transform_12, window_bounds = array<i64: 1, 128, 256>}, {pipeline_mode = #tpu.pipeline_mode<double_buffered>, transform_indices = @transform_13, window_bounds = array<i64: 1, 1, 256>}, {pipeline_mode = #tpu.pipeline_mode<double_buffered>, transform_indices = @transform_14, window_bounds = array<i64: 1, 256, 128>}, {pipeline_mode = #tpu.pipeline_mode<double_buffered>, transform_indices = @transform_15, window_bounds = array<i64: 1, 1, 128>}, {pipeline_mode = #tpu.pipeline_mode<synchronous>, transform_indices = @transform_16, window_bounds = array<i64: 128, 128>}, {pipeline_mode = #tpu.pipeline_mode<synchronous>, transform_indices = @transform_17, window_bounds = array<i64: 1, 128>}, {transform_indices = @transform_18, window_bounds = array<i64: 1, 16, 128>}]} {
    %c0_i32 = arith.constant 0 : i32
    %0 = arith.cmpi eq, %arg1, %c0_i32 : i32
    %1 = arith.extui %0 : i1 to i32
    %c0_i32_0 = arith.constant 0 : i32
    %2 = arith.cmpi ne, %1, %c0_i32_0 : i32
    scf.if %2 {
      %c0_85 = arith.constant 0 : index
      %c0_86 = arith.constant 0 : index
      %c0_87 = arith.constant 0 : index
      %185 = vector.load %arg2[%c0_85, %c0_86, %c0_87] : memref<1x16x64xf32, #tpu.memory_space<vmem>>, vector<1x16x64xf32>
      %186 = vector.shape_cast %185 : vector<1x16x64xf32> to vector<16x64xf32>
      %187 = arith.truncf %186 : vector<16x64xf32> to vector<16x64xbf16>
      %c0_88 = arith.constant 0 : index
      %c0_89 = arith.constant 0 : index
      %188 = vector.load %arg3[%c0_88, %c0_89] : memref<64x128xbf16, #tpu.memory_space<vmem>>, vector<64x128xbf16>
      %cst_90 = arith.constant dense<0.000000e+00> : vector<16x128xf32>
      %189 = tpu.matmul %187, %188, %cst_90 {dimension_numbers = #tpu.dot_dimension_numbers<[1], [0], [0], [1], [0, 0, 1, 1], [], []>} : vector<16x64xbf16>, vector<64x128xbf16>, vector<16x128xf32> -> vector<16x128xf32>
      %c0_91 = arith.constant 0 : index
      %c0_92 = arith.constant 0 : index
      %190 = vector.load %arg4[%c0_91, %c0_92] : memref<1x128xf32, #tpu.memory_space<vmem>>, vector<1x128xf32>
      %191 = vector.broadcast %190 : vector<1x128xf32> to vector<16x128xf32>
      %192 = arith.addf %189, %191 : vector<16x128xf32>
      %c0_93 = arith.constant 0 : index
      %c0_94 = arith.constant 0 : index
      %193 = vector.load %arg5[%c0_93, %c0_94] : memref<16x128xf32, #tpu.memory_space<vmem>>, vector<16x128xf32>
      %194 = arith.addf %192, %193 : vector<16x128xf32>
      %c0_95 = arith.constant 0 : index
      %c0_96 = arith.constant 0 : index
      %195 = vector.load %arg21[%c0_95, %c0_96] : memref<16x128xf32, #tpu.memory_space<vmem>>, vector<16x128xf32>
      tpu.vector_store %arg21[%c0_95, %c0_96], %194 {strides = array<i32>} : memref<16x128xf32, #tpu.memory_space<vmem>>, vector<16x128xf32>,
    } else {
    }
    %c0 = arith.constant 0 : index
    %c0_1 = arith.constant 0 : index
    %3 = vector.load %arg21[%c0, %c0_1] : memref<16x128xf32, #tpu.memory_space<vmem>>, vector<16x128xf32>
    %c0_2 = arith.constant 0 : index
    %c0_3 = arith.constant 0 : index
    %c0_4 = arith.constant 0 : index
    %4 = vector.load %arg6[%c0_2, %c0_3, %c0_4] : memref<1x1x128xf32, #tpu.memory_space<vmem>>, vector<1x1x128xf32>
    %5 = vector.shape_cast %4 : vector<1x1x128xf32> to vector<1x128xf32>
    %c0_5 = arith.constant 0 : index
    %c0_6 = arith.constant 0 : index
    %c0_7 = arith.constant 0 : index
    %6 = vector.load %arg7[%c0_5, %c0_6, %c0_7] : memref<1x1x128xf32, #tpu.memory_space<vmem>>, vector<1x1x128xf32>
    %7 = vector.shape_cast %6 : vector<1x1x128xf32> to vector<1x128xf32>
    %cst = arith.constant dense<0.000000e+00> : vector<16xf32>
    %8 = vector.multi_reduction <add>, %3, %cst [1] : vector<16x128xf32> to vector<16xf32>
    %9 = vector.shape_cast %8 : vector<16xf32> to vector<16x1xf32>
    %cst_8 = arith.constant 1.280000e+02 : f32
    %10 = vector.broadcast %cst_8 : f32 to vector<16x1xf32>
    %11 = arith.divf %9, %10 : vector<16x1xf32>
    %12 = vector.broadcast %11 : vector<16x1xf32> to vector<16x128xf32>
    %13 = arith.subf %3, %12 : vector<16x128xf32>
    %14 = arith.mulf %13, %13 : vector<16x128xf32>
    %cst_9 = arith.constant dense<0.000000e+00> : vector<16xf32>
    %15 = vector.multi_reduction <add>, %14, %cst_9 [1] : vector<16x128xf32> to vector<16xf32>
    %16 = vector.shape_cast %15 : vector<16xf32> to vector<16x1xf32>
    %cst_10 = arith.constant 1.280000e+02 : f32
    %17 = vector.broadcast %cst_10 : f32 to vector<16x1xf32>
    %18 = arith.divf %16, %17 : vector<16x1xf32>
    %19 = vector.broadcast %11 : vector<16x1xf32> to vector<16x128xf32>
    %20 = arith.subf %3, %19 : vector<16x128xf32>
    %cst_11 = arith.constant 9.99999974E-6 : f32
    %21 = vector.broadcast %cst_11 : f32 to vector<16x1xf32>
    %22 = arith.addf %18, %21 : vector<16x1xf32>
    %23 = math.rsqrt %22 : vector<16x1xf32>
    %24 = vector.broadcast %23 : vector<16x1xf32> to vector<16x128xf32>
    %25 = arith.mulf %20, %24 : vector<16x128xf32>
    %26 = vector.broadcast %5 : vector<1x128xf32> to vector<16x128xf32>
    %27 = arith.mulf %25, %26 : vector<16x128xf32>
    %28 = vector.broadcast %7 : vector<1x128xf32> to vector<16x128xf32>
    %29 = arith.addf %27, %28 : vector<16x128xf32>
    %30 = arith.truncf %29 : vector<16x128xf32> to vector<16x128xbf16>
    %c0_12 = arith.constant 0 : index
    %c0_13 = arith.constant 0 : index
    %c0_14 = arith.constant 0 : index
    %31 = vector.load %arg8[%c0_12, %c0_13, %c0_14] : memref<1x128x384xbf16, #tpu.memory_space<vmem>>, vector<1x128x384xbf16>
    %32 = vector.shape_cast %31 : vector<1x128x384xbf16> to vector<128x384xbf16>
    %cst_15 = arith.constant dense<0.000000e+00> : vector<16x384xf32>
    %33 = tpu.matmul %30, %32, %cst_15 {dimension_numbers = #tpu.dot_dimension_numbers<[1], [0], [0], [1], [0, 0, 1, 1], [], []>} : vector<16x128xbf16>, vector<128x384xbf16>, vector<16x384xf32> -> vector<16x384xf32>
    %c0_16 = arith.constant 0 : index
    %c0_17 = arith.constant 0 : index
    %c0_18 = arith.constant 0 : index
    %34 = vector.load %arg9[%c0_16, %c0_17, %c0_18] : memref<1x1x384xf32, #tpu.memory_space<vmem>>, vector<1x1x384xf32>
    %35 = vector.shape_cast %34 : vector<1x1x384xf32> to vector<1x384xf32>
    %36 = vector.broadcast %35 : vector<1x384xf32> to vector<16x384xf32>
    %37 = arith.addf %33, %36 : vector<16x384xf32>
    %38 = arith.truncf %37 : vector<16x384xf32> to vector<16x384xbf16>
    %39 = vector.extract_strided_slice %38 {offsets = [0, 0], sizes = [16, 32], strides = [1, 1]} : vector<16x384xbf16> to vector<16x32xbf16>
    %40 = vector.extract_strided_slice %38 {offsets = [0, 128], sizes = [16, 32], strides = [1, 1]} : vector<16x384xbf16> to vector<16x32xbf16>
    %41 = vector.extract_strided_slice %38 {offsets = [0, 256], sizes = [16, 32], strides = [1, 1]} : vector<16x384xbf16> to vector<16x32xbf16>
    %cst_19 = arith.constant dense<0.000000e+00> : vector<16x16xf32>
    %42 = tpu.matmul %39, %40, %cst_19 {dimension_numbers = #tpu.dot_dimension_numbers<[1], [1], [0], [0], [0, 0, 1, 0], [], []>} : vector<16x32xbf16>, vector<16x32xbf16>, vector<16x16xf32> -> vector<16x16xf32>
    %cst_20 = arith.constant 0.176776692 : f32
    %43 = vector.broadcast %cst_20 : f32 to vector<16x16xf32>
    %44 = arith.mulf %42, %43 : vector<16x16xf32>
    %cst_21 = arith.constant dense<0xFF800000> : vector<16xf32>
    %45 = vector.multi_reduction <maximumf>, %44, %cst_21 [1] : vector<16x16xf32> to vector<16xf32>
    %46 = vector.shape_cast %45 : vector<16xf32> to vector<16x1xf32>
    %47 = vector.broadcast %46 : vector<16x1xf32> to vector<16x16xf32>
    %48 = arith.subf %44, %47 : vector<16x16xf32>
    %49 = math.exp %48 : vector<16x16xf32>
    %cst_22 = arith.constant dense<0.000000e+00> : vector<16xf32>
    %50 = vector.multi_reduction <add>, %49, %cst_22 [1] : vector<16x16xf32> to vector<16xf32>
    %51 = vector.shape_cast %50 : vector<16xf32> to vector<16x1xf32>
    %52 = tpu.reciprocal %51 {approx = true} : vector<16x1xf32> -> vector<16x1xf32>
    %53 = vector.broadcast %52 : vector<16x1xf32> to vector<16x16xf32>
    %54 = arith.mulf %49, %53 : vector<16x16xf32>
    %55 = arith.truncf %54 : vector<16x16xf32> to vector<16x16xbf16>
    %cst_23 = arith.constant dense<0.000000e+00> : vector<16x32xf32>
    %56 = tpu.matmul %55, %41, %cst_23 {dimension_numbers = #tpu.dot_dimension_numbers<[1], [0], [0], [1], [0, 0, 1, 1], [], []>} : vector<16x16xbf16>, vector<16x32xbf16>, vector<16x32xf32> -> vector<16x32xf32>
    %c0_24 = arith.constant 0 : index
    %c0_25 = arith.constant 0 : index
    %57 = vector.load %arg22[%c0_24, %c0_25] : memref<16x128xf32, #tpu.memory_space<vmem>>, vector<16x32xf32>
    tpu.vector_store %arg22[%c0_24, %c0_25], %56 {strides = array<i32>} : memref<16x128xf32, #tpu.memory_space<vmem>>, vector<16x32xf32>,
    %58 = vector.extract_strided_slice %38 {offsets = [0, 32], sizes = [16, 32], strides = [1, 1]} : vector<16x384xbf16> to vector<16x32xbf16>
    %59 = vector.extract_strided_slice %38 {offsets = [0, 160], sizes = [16, 32], strides = [1, 1]} : vector<16x384xbf16> to vector<16x32xbf16>
    %60 = vector.extract_strided_slice %38 {offsets = [0, 288], sizes = [16, 32], strides = [1, 1]} : vector<16x384xbf16> to vector<16x32xbf16>
    %cst_26 = arith.constant dense<0.000000e+00> : vector<16x16xf32>
    %61 = tpu.matmul %58, %59, %cst_26 {dimension_numbers = #tpu.dot_dimension_numbers<[1], [1], [0], [0], [0, 0, 1, 0], [], []>} : vector<16x32xbf16>, vector<16x32xbf16>, vector<16x16xf32> -> vector<16x16xf32>
    %cst_27 = arith.constant 0.176776692 : f32
    %62 = vector.broadcast %cst_27 : f32 to vector<16x16xf32>
    %63 = arith.mulf %61, %62 : vector<16x16xf32>
    %cst_28 = arith.constant dense<0xFF800000> : vector<16xf32>
    %64 = vector.multi_reduction <maximumf>, %63, %cst_28 [1] : vector<16x16xf32> to vector<16xf32>
    %65 = vector.shape_cast %64 : vector<16xf32> to vector<16x1xf32>
    %66 = vector.broadcast %65 : vector<16x1xf32> to vector<16x16xf32>
    %67 = arith.subf %63, %66 : vector<16x16xf32>
    %68 = math.exp %67 : vector<16x16xf32>
    %cst_29 = arith.constant dense<0.000000e+00> : vector<16xf32>
    %69 = vector.multi_reduction <add>, %68, %cst_29 [1] : vector<16x16xf32> to vector<16xf32>
    %70 = vector.shape_cast %69 : vector<16xf32> to vector<16x1xf32>
    %71 = tpu.reciprocal %70 {approx = true} : vector<16x1xf32> -> vector<16x1xf32>
    %72 = vector.broadcast %71 : vector<16x1xf32> to vector<16x16xf32>
    %73 = arith.mulf %68, %72 : vector<16x16xf32>
    %74 = arith.truncf %73 : vector<16x16xf32> to vector<16x16xbf16>
    %cst_30 = arith.constant dense<0.000000e+00> : vector<16x32xf32>
    %75 = tpu.matmul %74, %60, %cst_30 {dimension_numbers = #tpu.dot_dimension_numbers<[1], [0], [0], [1], [0, 0, 1, 1], [], []>} : vector<16x16xbf16>, vector<16x32xbf16>, vector<16x32xf32> -> vector<16x32xf32>
    %c0_31 = arith.constant 0 : index
    %c32 = arith.constant 32 : index
    %76 = vector.load %arg22[%c0_31, %c32] : memref<16x128xf32, #tpu.memory_space<vmem>>, vector<16x32xf32>
    tpu.vector_store %arg22[%c0_31, %c32], %75 {strides = array<i32>} : memref<16x128xf32, #tpu.memory_space<vmem>>, vector<16x32xf32>,
    %77 = vector.extract_strided_slice %38 {offsets = [0, 64], sizes = [16, 32], strides = [1, 1]} : vector<16x384xbf16> to vector<16x32xbf16>
    %78 = vector.extract_strided_slice %38 {offsets = [0, 192], sizes = [16, 32], strides = [1, 1]} : vector<16x384xbf16> to vector<16x32xbf16>
    %79 = vector.extract_strided_slice %38 {offsets = [0, 320], sizes = [16, 32], strides = [1, 1]} : vector<16x384xbf16> to vector<16x32xbf16>
    %cst_32 = arith.constant dense<0.000000e+00> : vector<16x16xf32>
    %80 = tpu.matmul %77, %78, %cst_32 {dimension_numbers = #tpu.dot_dimension_numbers<[1], [1], [0], [0], [0, 0, 1, 0], [], []>} : vector<16x32xbf16>, vector<16x32xbf16>, vector<16x16xf32> -> vector<16x16xf32>
    %cst_33 = arith.constant 0.176776692 : f32
    %81 = vector.broadcast %cst_33 : f32 to vector<16x16xf32>
    %82 = arith.mulf %80, %81 : vector<16x16xf32>
    %cst_34 = arith.constant dense<0xFF800000> : vector<16xf32>
    %83 = vector.multi_reduction <maximumf>, %82, %cst_34 [1] : vector<16x16xf32> to vector<16xf32>
    %84 = vector.shape_cast %83 : vector<16xf32> to vector<16x1xf32>
    %85 = vector.broadcast %84 : vector<16x1xf32> to vector<16x16xf32>
    %86 = arith.subf %82, %85 : vector<16x16xf32>
    %87 = math.exp %86 : vector<16x16xf32>
    %cst_35 = arith.constant dense<0.000000e+00> : vector<16xf32>
    %88 = vector.multi_reduction <add>, %87, %cst_35 [1] : vector<16x16xf32> to vector<16xf32>
    %89 = vector.shape_cast %88 : vector<16xf32> to vector<16x1xf32>
    %90 = tpu.reciprocal %89 {approx = true} : vector<16x1xf32> -> vector<16x1xf32>
    %91 = vector.broadcast %90 : vector<16x1xf32> to vector<16x16xf32>
    %92 = arith.mulf %87, %91 : vector<16x16xf32>
    %93 = arith.truncf %92 : vector<16x16xf32> to vector<16x16xbf16>
    %cst_36 = arith.constant dense<0.000000e+00> : vector<16x32xf32>
    %94 = tpu.matmul %93, %79, %cst_36 {dimension_numbers = #tpu.dot_dimension_numbers<[1], [0], [0], [1], [0, 0, 1, 1], [], []>} : vector<16x16xbf16>, vector<16x32xbf16>, vector<16x32xf32> -> vector<16x32xf32>
    %c0_37 = arith.constant 0 : index
    %c64 = arith.constant 64 : index
    %95 = vector.load %arg22[%c0_37, %c64] : memref<16x128xf32, #tpu.memory_space<vmem>>, vector<16x32xf32>
    tpu.vector_store %arg22[%c0_37, %c64], %94 {strides = array<i32>} : memref<16x128xf32, #tpu.memory_space<vmem>>, vector<16x32xf32>,
    %96 = vector.extract_strided_slice %38 {offsets = [0, 96], sizes = [16, 32], strides = [1, 1]} : vector<16x384xbf16> to vector<16x32xbf16>
    %97 = vector.extract_strided_slice %38 {offsets = [0, 224], sizes = [16, 32], strides = [1, 1]} : vector<16x384xbf16> to vector<16x32xbf16>
    %98 = vector.extract_strided_slice %38 {offsets = [0, 352], sizes = [16, 32], strides = [1, 1]} : vector<16x384xbf16> to vector<16x32xbf16>
    %cst_38 = arith.constant dense<0.000000e+00> : vector<16x16xf32>
    %99 = tpu.matmul %96, %97, %cst_38 {dimension_numbers = #tpu.dot_dimension_numbers<[1], [1], [0], [0], [0, 0, 1, 0], [], []>} : vector<16x32xbf16>, vector<16x32xbf16>, vector<16x16xf32> -> vector<16x16xf32>
    %cst_39 = arith.constant 0.176776692 : f32
    %100 = vector.broadcast %cst_39 : f32 to vector<16x16xf32>
    %101 = arith.mulf %99, %100 : vector<16x16xf32>
    %cst_40 = arith.constant dense<0xFF800000> : vector<16xf32>
    %102 = vector.multi_reduction <maximumf>, %101, %cst_40 [1] : vector<16x16xf32> to vector<16xf32>
    %103 = vector.shape_cast %102 : vector<16xf32> to vector<16x1xf32>
    %104 = vector.broadcast %103 : vector<16x1xf32> to vector<16x16xf32>
    %105 = arith.subf %101, %104 : vector<16x16xf32>
    %106 = math.exp %105 : vector<16x16xf32>
    %cst_41 = arith.constant dense<0.000000e+00> : vector<16xf32>
    %107 = vector.multi_reduction <add>, %106, %cst_41 [1] : vector<16x16xf32> to vector<16xf32>
    %108 = vector.shape_cast %107 : vector<16xf32> to vector<16x1xf32>
    %109 = tpu.reciprocal %108 {approx = true} : vector<16x1xf32> -> vector<16x1xf32>
    %110 = vector.broadcast %109 : vector<16x1xf32> to vector<16x16xf32>
    %111 = arith.mulf %106, %110 : vector<16x16xf32>
    %112 = arith.truncf %111 : vector<16x16xf32> to vector<16x16xbf16>
    %cst_42 = arith.constant dense<0.000000e+00> : vector<16x32xf32>
    %113 = tpu.matmul %112, %98, %cst_42 {dimension_numbers = #tpu.dot_dimension_numbers<[1], [0], [0], [1], [0, 0, 1, 1], [], []>} : vector<16x16xbf16>, vector<16x32xbf16>, vector<16x32xf32> -> vector<16x32xf32>
    %c0_43 = arith.constant 0 : index
    %c96 = arith.constant 96 : index
    %114 = vector.load %arg22[%c0_43, %c96] : memref<16x128xf32, #tpu.memory_space<vmem>>, vector<16x32xf32>
    tpu.vector_store %arg22[%c0_43, %c96], %113 {strides = array<i32>} : memref<16x128xf32, #tpu.memory_space<vmem>>, vector<16x32xf32>,
    %c0_44 = arith.constant 0 : index
    %c0_45 = arith.constant 0 : index
    %115 = vector.load %arg22[%c0_44, %c0_45] : memref<16x128xf32, #tpu.memory_space<vmem>>, vector<16x128xf32>
    %116 = arith.truncf %115 : vector<16x128xf32> to vector<16x128xbf16>
    %c0_46 = arith.constant 0 : index
    %c0_47 = arith.constant 0 : index
    %c0_48 = arith.constant 0 : index
    %117 = vector.load %arg10[%c0_46, %c0_47, %c0_48] : memref<1x128x128xbf16, #tpu.memory_space<vmem>>, vector<1x128x128xbf16>
    %118 = vector.shape_cast %117 : vector<1x128x128xbf16> to vector<128x128xbf16>
    %cst_49 = arith.constant dense<0.000000e+00> : vector<16x128xf32>
    %119 = tpu.matmul %116, %118, %cst_49 {dimension_numbers = #tpu.dot_dimension_numbers<[1], [0], [0], [1], [0, 0, 1, 1], [], []>} : vector<16x128xbf16>, vector<128x128xbf16>, vector<16x128xf32> -> vector<16x128xf32>
    %c0_50 = arith.constant 0 : index
    %c0_51 = arith.constant 0 : index
    %c0_52 = arith.constant 0 : index
    %120 = vector.load %arg11[%c0_50, %c0_51, %c0_52] : memref<1x1x128xf32, #tpu.memory_space<vmem>>, vector<1x1x128xf32>
    %121 = vector.shape_cast %120 : vector<1x1x128xf32> to vector<1x128xf32>
    %122 = vector.broadcast %121 : vector<1x128xf32> to vector<16x128xf32>
    %123 = arith.addf %119, %122 : vector<16x128xf32>
    %124 = arith.addf %3, %123 : vector<16x128xf32>
    %c0_53 = arith.constant 0 : index
    %c0_54 = arith.constant 0 : index
    %c0_55 = arith.constant 0 : index
    %125 = vector.load %arg12[%c0_53, %c0_54, %c0_55] : memref<1x1x128xf32, #tpu.memory_space<vmem>>, vector<1x1x128xf32>
    %126 = vector.shape_cast %125 : vector<1x1x128xf32> to vector<1x128xf32>
    %c0_56 = arith.constant 0 : index
    %c0_57 = arith.constant 0 : index
    %c0_58 = arith.constant 0 : index
    %127 = vector.load %arg13[%c0_56, %c0_57, %c0_58] : memref<1x1x128xf32, #tpu.memory_space<vmem>>, vector<1x1x128xf32>
    %128 = vector.shape_cast %127 : vector<1x1x128xf32> to vector<1x128xf32>
    %cst_59 = arith.constant dense<0.000000e+00> : vector<16xf32>
    %129 = vector.multi_reduction <add>, %124, %cst_59 [1] : vector<16x128xf32> to vector<16xf32>
    %130 = vector.shape_cast %129 : vector<16xf32> to vector<16x1xf32>
    %cst_60 = arith.constant 1.280000e+02 : f32
    %131 = vector.broadcast %cst_60 : f32 to vector<16x1xf32>
    %132 = arith.divf %130, %131 : vector<16x1xf32>
    %133 = vector.broadcast %132 : vector<16x1xf32> to vector<16x128xf32>
    %134 = arith.subf %124, %133 : vector<16x128xf32>
    %135 = arith.mulf %134, %134 : vector<16x128xf32>
    %cst_61 = arith.constant dense<0.000000e+00> : vector<16xf32>
    %136 = vector.multi_reduction <add>, %135, %cst_61 [1] : vector<16x128xf32> to vector<16xf32>
    %137 = vector.shape_cast %136 : vector<16xf32> to vector<16x1xf32>
    %cst_62 = arith.constant 1.280000e+02 : f32
    %138 = vector.broadcast %cst_62 : f32 to vector<16x1xf32>
    %139 = arith.divf %137, %138 : vector<16x1xf32>
    %140 = vector.broadcast %132 : vector<16x1xf32> to vector<16x128xf32>
    %141 = arith.subf %124, %140 : vector<16x128xf32>
    %cst_63 = arith.constant 9.99999974E-6 : f32
    %142 = vector.broadcast %cst_63 : f32 to vector<16x1xf32>
    %143 = arith.addf %139, %142 : vector<16x1xf32>
    %144 = math.rsqrt %143 : vector<16x1xf32>
    %145 = vector.broadcast %144 : vector<16x1xf32> to vector<16x128xf32>
    %146 = arith.mulf %141, %145 : vector<16x128xf32>
    %147 = vector.broadcast %126 : vector<1x128xf32> to vector<16x128xf32>
    %148 = arith.mulf %146, %147 : vector<16x128xf32>
    %149 = vector.broadcast %128 : vector<1x128xf32> to vector<16x128xf32>
    %150 = arith.addf %148, %149 : vector<16x128xf32>
    %151 = arith.truncf %150 : vector<16x128xf32> to vector<16x128xbf16>
    %c0_64 = arith.constant 0 : index
    %c0_65 = arith.constant 0 : index
    %c0_66 = arith.constant 0 : index
    %152 = vector.load %arg14[%c0_64, %c0_65, %c0_66] : memref<1x128x256xbf16, #tpu.memory_space<vmem>>, vector<1x128x256xbf16>
    %153 = vector.shape_cast %152 : vector<1x128x256xbf16> to vector<128x256xbf16>
    %cst_67 = arith.constant dense<0.000000e+00> : vector<16x256xf32>
    %154 = tpu.matmul %151, %153, %cst_67 {dimension_numbers = #tpu.dot_dimension_numbers<[1], [0], [0], [1], [0, 0, 1, 1], [], []>} : vector<16x128xbf16>, vector<128x256xbf16>, vector<16x256xf32> -> vector<16x256xf32>
    %c0_68 = arith.constant 0 : index
    %c0_69 = arith.constant 0 : index
    %c0_70 = arith.constant 0 : index
    %155 = vector.load %arg15[%c0_68, %c0_69, %c0_70] : memref<1x1x256xf32, #tpu.memory_space<vmem>>, vector<1x1x256xf32>
    %156 = vector.shape_cast %155 : vector<1x1x256xf32> to vector<1x256xf32>
    %157 = vector.broadcast %156 : vector<1x256xf32> to vector<16x256xf32>
    %158 = arith.addf %154, %157 : vector<16x256xf32>
    %159 = arith.mulf %158, %158 : vector<16x256xf32>
    %160 = arith.mulf %158, %159 : vector<16x256xf32>
    %cst_71 = arith.constant 4.471500e-02 : f32
    %161 = vector.broadcast %cst_71 : f32 to vector<16x256xf32>
    %162 = arith.mulf %161, %160 : vector<16x256xf32>
    %163 = arith.addf %158, %162 : vector<16x256xf32>
    %cst_72 = arith.constant 0.797884583 : f32
    %164 = vector.broadcast %cst_72 : f32 to vector<16x256xf32>
    %165 = arith.mulf %164, %163 : vector<16x256xf32>
    %166 = math.tanh %165 : vector<16x256xf32>
    %cst_73 = arith.constant 1.000000e+00 : f32
    %167 = vector.broadcast %cst_73 : f32 to vector<16x256xf32>
    %168 = arith.addf %167, %166 : vector<16x256xf32>
    %cst_74 = arith.constant 5.000000e-01 : f32
    %169 = vector.broadcast %cst_74 : f32 to vector<16x256xf32>
    %170 = arith.mulf %169, %168 : vector<16x256xf32>
    %171 = arith.mulf %158, %170 : vector<16x256xf32>
    %172 = arith.truncf %171 : vector<16x256xf32> to vector<16x256xbf16>
    %c0_75 = arith.constant 0 : index
    %c0_76 = arith.constant 0 : index
    %c0_77 = arith.constant 0 : index
    %173 = vector.load %arg16[%c0_75, %c0_76, %c0_77] : memref<1x256x128xbf16, #tpu.memory_space<vmem>>, vector<1x256x128xbf16>
    %174 = vector.shape_cast %173 : vector<1x256x128xbf16> to vector<256x128xbf16>
    %cst_78 = arith.constant dense<0.000000e+00> : vector<16x128xf32>
    %175 = tpu.matmul %172, %174, %cst_78 {dimension_numbers = #tpu.dot_dimension_numbers<[1], [0], [0], [1], [0, 0, 1, 1], [], []>} : vector<16x256xbf16>, vector<256x128xbf16>, vector<16x128xf32> -> vector<16x128xf32>
    %176 = arith.addf %124, %175 : vector<16x128xf32>
    %c0_79 = arith.constant 0 : index
    %c0_80 = arith.constant 0 : index
    %c0_81 = arith.constant 0 : index
    %177 = vector.load %arg17[%c0_79, %c0_80, %c0_81] : memref<1x1x128xf32, #tpu.memory_space<vmem>>, vector<1x1x128xf32>
    %178 = vector.shape_cast %177 : vector<1x1x128xf32> to vector<1x128xf32>
    %179 = vector.broadcast %178 : vector<1x128xf32> to vector<16x128xf32>
    %180 = arith.addf %176, %179 : vector<16x128xf32>
    %c0_82 = arith.constant 0 : index
    %c0_83 = arith.constant 0 : index
    %181 = vector.load %arg21[%c0_82, %c0_83] : memref<16x128xf32, #tpu.memory_space<vmem>>, vector<16x128xf32>
    tpu.vector_store %arg21[%c0_82, %c0_83], %180 {strides = array<i32>} : memref<16x128xf32, #tpu.memory_space<vmem>>, vector<16x128xf32>,
    %c1_i32 = arith.constant 1 : i32
    %182 = arith.cmpi eq, %arg1, %c1_i32 : i32
    %183 = arith.extui %182 : i1 to i32
    %c0_i32_84 = arith.constant 0 : i32
    %184 = arith.cmpi ne, %183, %c0_i32_84 : i32
    scf.if %184 {
      %185 = arith.truncf %180 : vector<16x128xf32> to vector<16x128xbf16>
      %c0_85 = arith.constant 0 : index
      %c0_86 = arith.constant 0 : index
      %186 = vector.load %arg18[%c0_85, %c0_86] : memref<128x128xbf16, #tpu.memory_space<vmem>>, vector<128x128xbf16>
      %cst_87 = arith.constant dense<0.000000e+00> : vector<16x128xf32>
      %187 = tpu.matmul %185, %186, %cst_87 {dimension_numbers = #tpu.dot_dimension_numbers<[1], [0], [0], [1], [0, 0, 1, 1], [], []>} : vector<16x128xbf16>, vector<128x128xbf16>, vector<16x128xf32> -> vector<16x128xf32>
      %c0_88 = arith.constant 0 : index
      %c0_89 = arith.constant 0 : index
      %188 = vector.load %arg19[%c0_88, %c0_89] : memref<1x128xf32, #tpu.memory_space<vmem>>, vector<1x128xf32>
      %189 = vector.broadcast %188 : vector<1x128xf32> to vector<16x128xf32>
      %190 = arith.addf %187, %189 : vector<16x128xf32>
      %c0_90 = arith.constant 0 : index
      %c0_91 = arith.constant 0 : index
      %c0_92 = arith.constant 0 : index
      %191 = vector.load %arg20[%c0_90, %c0_91, %c0_92] : memref<1x16x128xf32, #tpu.memory_space<vmem>>, vector<1x16x128xf32>
      %192 = vector.shape_cast %191 : vector<1x16x128xf32> to vector<16x128xf32>
      %193 = vector.shape_cast %190 : vector<16x128xf32> to vector<1x16x128xf32>
      tpu.vector_store %arg20[%c0_90, %c0_91, %c0_92], %193 {strides = array<i32>} : memref<1x16x128xf32, #tpu.memory_space<vmem>>, vector<1x16x128xf32>,
    } else {
    }
    return
  }
  func.func @transform_0(%arg0: i32, %arg1: i32) -> (i32, i32, i32) {
    %c0_i32 = arith.constant 0 : i32
    %c0_i32_0 = arith.constant 0 : i32
    %c0_i32_1 = arith.constant 0 : i32
    return %arg0, %c0_i32, %c0_i32_0 : i32, i32, i32
  }
  func.func @transform_1(%arg0: i32, %arg1: i32) -> (i32, i32) {
    %c0_i32 = arith.constant 0 : i32
    %c0_i32_0 = arith.constant 0 : i32
    %c0_i32_1 = arith.constant 0 : i32
    return %c0_i32, %c0_i32_0 : i32, i32
  }
  func.func @transform_2(%arg0: i32, %arg1: i32) -> (i32, i32) {
    %c0_i32 = arith.constant 0 : i32
    %c0_i32_0 = arith.constant 0 : i32
    %c0_i32_1 = arith.constant 0 : i32
    return %c0_i32, %c0_i32_0 : i32, i32
  }
  func.func @transform_3(%arg0: i32, %arg1: i32) -> (i32, i32) {
    %c0_i32 = arith.constant 0 : i32
    %c0_i32_0 = arith.constant 0 : i32
    %c0_i32_1 = arith.constant 0 : i32
    return %c0_i32, %c0_i32_0 : i32, i32
  }
  func.func @transform_4(%arg0: i32, %arg1: i32) -> (i32, i32, i32) {
    %c0_i32 = arith.constant 0 : i32
    %c0_i32_0 = arith.constant 0 : i32
    %c0_i32_1 = arith.constant 0 : i32
    return %arg1, %c0_i32, %c0_i32_0 : i32, i32, i32
  }
  func.func @transform_5(%arg0: i32, %arg1: i32) -> (i32, i32, i32) {
    %c0_i32 = arith.constant 0 : i32
    %c0_i32_0 = arith.constant 0 : i32
    %c0_i32_1 = arith.constant 0 : i32
    return %arg1, %c0_i32, %c0_i32_0 : i32, i32, i32
  }
  func.func @transform_6(%arg0: i32, %arg1: i32) -> (i32, i32, i32) {
    %c0_i32 = arith.constant 0 : i32
    %c0_i32_0 = arith.constant 0 : i32
    %c0_i32_1 = arith.constant 0 : i32
    return %arg1, %c0_i32, %c0_i32_0 : i32, i32, i32
  }
  func.func @transform_7(%arg0: i32, %arg1: i32) -> (i32, i32, i32) {
    %c0_i32 = arith.constant 0 : i32
    %c0_i32_0 = arith.constant 0 : i32
    %c0_i32_1 = arith.constant 0 : i32
    return %arg1, %c0_i32, %c0_i32_0 : i32, i32, i32
  }
  func.func @transform_8(%arg0: i32, %arg1: i32) -> (i32, i32, i32) {
    %c0_i32 = arith.constant 0 : i32
    %c0_i32_0 = arith.constant 0 : i32
    %c0_i32_1 = arith.constant 0 : i32
    return %arg1, %c0_i32, %c0_i32_0 : i32, i32, i32
  }
  func.func @transform_9(%arg0: i32, %arg1: i32) -> (i32, i32, i32) {
    %c0_i32 = arith.constant 0 : i32
    %c0_i32_0 = arith.constant 0 : i32
    %c0_i32_1 = arith.constant 0 : i32
    return %arg1, %c0_i32, %c0_i32_0 : i32, i32, i32
  }
  func.func @transform_10(%arg0: i32, %arg1: i32) -> (i32, i32, i32) {
    %c0_i32 = arith.constant 0 : i32
    %c0_i32_0 = arith.constant 0 : i32
    %c0_i32_1 = arith.constant 0 : i32
    return %arg1, %c0_i32, %c0_i32_0 : i32, i32, i32
  }
  func.func @transform_11(%arg0: i32, %arg1: i32) -> (i32, i32, i32) {
    %c0_i32 = arith.constant 0 : i32
    %c0_i32_0 = arith.constant 0 : i32
    %c0_i32_1 = arith.constant 0 : i32
    return %arg1, %c0_i32, %c0_i32_0 : i32, i32, i32
  }
  func.func @transform_12(%arg0: i32, %arg1: i32) -> (i32, i32, i32) {
    %c0_i32 = arith.constant 0 : i32
    %c0_i32_0 = arith.constant 0 : i32
    %c0_i32_1 = arith.constant 0 : i32
    return %arg1, %c0_i32, %c0_i32_0 : i32, i32, i32
  }
  func.func @transform_13(%arg0: i32, %arg1: i32) -> (i32, i32, i32) {
    %c0_i32 = arith.constant 0 : i32
    %c0_i32_0 = arith.constant 0 : i32
    %c0_i32_1 = arith.constant 0 : i32
    return %arg1, %c0_i32, %c0_i32_0 : i32, i32, i32
  }
  func.func @transform_14(%arg0: i32, %arg1: i32) -> (i32, i32, i32) {
    %c0_i32 = arith.constant 0 : i32
    %c0_i32_0 = arith.constant 0 : i32
    %c0_i32_1 = arith.constant 0 : i32
    return %arg1, %c0_i32, %c0_i32_0 : i32, i32, i32
  }
  func.func @transform_15(%arg0: i32, %arg1: i32) -> (i32, i32, i32) {
    %c0_i32 = arith.constant 0 : i32
    %c0_i32_0 = arith.constant 0 : i32
    %c0_i32_1 = arith.constant 0 : i32
    return %arg1, %c0_i32, %c0_i32_0 : i32, i32, i32
  }
  func.func @transform_16(%arg0: i32, %arg1: i32) -> (i32, i32) {
    %c0_i32 = arith.constant 0 : i32
    %c0_i32_0 = arith.constant 0 : i32
    %c0_i32_1 = arith.constant 0 : i32
    return %c0_i32, %c0_i32_0 : i32, i32
  }
  func.func @transform_17(%arg0: i32, %arg1: i32) -> (i32, i32) {
    %c0_i32 = arith.constant 0 : i32
    %c0_i32_0 = arith.constant 0 : i32
    %c0_i32_1 = arith.constant 0 : i32
    return %c0_i32, %c0_i32_0 : i32, i32
  }
  func.func @transform_18(%arg0: i32, %arg1: i32) -> (i32, i32, i32) {
    %c0_i32 = arith.constant 0 : i32
    %c0_i32_0 = arith.constant 0 : i32
    %c0_i32_1 = arith.constant 0 : i32
    return %arg0, %c0_i32, %c0_i32_0 : i32, i32, i32
  }
}

</mosaic_0001>

<llo_original>
// kernel: vit_forward.1
$region0: #{vit_forward.1}
  #allocation0 [shape = 'u32[]', space=smem, size = 0x4, offset = 0x4, fixed_abs, tag = 'smem constant byte address 0x4 - core index']
  #allocation1 [shape = 'u32[72,128]{1,0:T(1,128)}', space=vmem, size = 0x9000, scoped, tag = 'internal scratch']
  #allocation2 [shape = 'f32[16,128]{1,0:T(8,128)}', space=vmem, size = 0x2000, scoped, tag = 'scratch operand']
  #allocation3 [shape = 'f32[16,128]{1,0:T(8,128)}', space=vmem, size = 0x2000, scoped, tag = 'scratch operand']
  %s0 = inlined_call_operand.vmem [shape: f32[2,16,64], index: 0, kind: input, shape index: {}]
  %s1 = inlined_call_operand.vmem [shape: bf16[64,128], index: 1, kind: input, shape index: {}]
  %s2 = inlined_call_operand.vmem [shape: f32[1,128], index: 2, kind: input, shape index: {}]
  %s3 = inlined_call_operand.vmem [shape: f32[16,128], index: 3, kind: input, shape index: {}]
  %s4 = inlined_call_operand.vmem [shape: f32[2,1,128], index: 4, kind: input, shape index: {}]
  %s5 = inlined_call_operand.vmem [shape: f32[2,1,128], index: 5, kind: input, shape index: {}]
  %s6 = inlined_call_operand.vmem [shape: bf16[2,128,384], index: 6, kind: input, shape index: {}]
  %s7 = inlined_call_operand.vmem [shape: f32[2,1,384], index: 7, kind: input, shape index: {}]
  %s8 = inlined_call_operand.vmem [shape: bf16[2,128,128], index: 8, kind: input, shape index: {}]
  %s9 = inlined_call_operand.vmem [shape: f32[2,1,128], index: 9, kind: input, shape index: {}]
  %s10 = inlined_call_operand.vmem [shape: f32[2,1,128], index: 10, kind: input, shape index: {}]
  %s11 = inlined_call_operand.vmem [shape: f32[2,1,128], index: 11, kind: input, shape index: {}]
  %s12 = inlined_call_operand.vmem [shape: bf16[2,128,256], index: 12, kind: input, shape index: {}]
  %s13 = inlined_call_operand.vmem [shape: f32[2,1,256], index: 13, kind: input, shape index: {}]
  %s14 = inlined_call_operand.vmem [shape: bf16[2,256,128], index: 14, kind: input, shape index: {}]
  %s15 = inlined_call_operand.vmem [shape: f32[2,1,128], index: 15, kind: input, shape index: {}]
  %s16 = inlined_call_operand.vmem [shape: bf16[128,128], index: 16, kind: input, shape index: {}]
  %s17 = inlined_call_operand.vmem [shape: f32[1,128], index: 17, kind: input, shape index: {}]
  %s18 = inlined_call_operand.vmem [shape: f32[2,16,128], index: 18, kind: output, shape index: {}]
  %s19 = sld [smem:[#allocation0]]
  $region113: #{vit_forward.1} parent=0
    _
  %s21 = ssub.s32 1, %s19
  %s22 = scalar_select 0, %s21, %s19
  loop: start=0, step=1, limit=6
  $region2: #{vit_forward.1} parent=0 // loop_pre_header
    _
  $region3: #{vit_forward.1} parent=0 // loop_header
    %s24 = sphi 0, %s28
    %p25 = scmp.ge.s32.totalorder %s24, 6
    %s31 = sphi 0, %s43
    %s32 = sphi 0, %s39
    %s33 = sphi 0, %s31
    %s34 = sphi 0, %s32
    %s35 = sphi 0, %s33
    %s36 = sphi 0, %s34
    %s46 = sphi 0, %s48
    %s49 = sphi 0, %s46
    %s50 = sphi 0, %s49
    %s66 = sphi 0, %s50
    %s70 = sphi 0, %s70
    %s72 = sphi 0, %s70
    %s73 = sphi 0, %s72
    %s87 = sphi 0, %s73
    %s91 = sphi 0, %s91
    %s93 = sphi 0, %s91
    %s94 = sphi 0, %s93
    %s108 = sphi 0, %s94
    %s112 = sphi 0, %s112
    %s114 = sphi 0, %s112
    %s115 = sphi 0, %s114
    %s129 = sphi 0, %s115
    %s135 = sphi 0, %s137
    %s138 = sphi 0, %s135
    %s139 = sphi 0, %s138
    %s155 = sphi 0, %s139
    %s161 = sphi 0, %s163
    %s164 = sphi 0, %s161
    %s165 = sphi 0, %s164
    %s181 = sphi 0, %s165
    %s187 = sphi 0, %s189
    %s190 = sphi 0, %s187
    %s191 = sphi 0, %s190
    %s207 = sphi 0, %s191
    %s213 = sphi 0, %s215
    %s216 = sphi 0, %s213
    %s217 = sphi 0, %s216
    %s233 = sphi 0, %s217
    %s239 = sphi 0, %s241
    %s242 = sphi 0, %s239
    %s243 = sphi 0, %s242
    %s259 = sphi 0, %s243
    %s265 = sphi 0, %s267
    %s268 = sphi 0, %s265
    %s269 = sphi 0, %s268
    %s285 = sphi 0, %s269
    %s291 = sphi 0, %s293
    %s294 = sphi 0, %s291
    %s295 = sphi 0, %s294
    %s311 = sphi 0, %s295
    %s317 = sphi 0, %s319
    %s320 = sphi 0, %s317
    %s321 = sphi 0, %s320
    %s337 = sphi 0, %s321
    %s343 = sphi 0, %s345
    %s346 = sphi 0, %s343
    %s347 = sphi 0, %s346
    %s363 = sphi 0, %s347
    %s369 = sphi 0, %s371
    %s372 = sphi 0, %s369
    %s373 = sphi 0, %s372
    %s389 = sphi 0, %s373
    %s395 = sphi 0, %s397
    %s398 = sphi 0, %s395
    %s399 = sphi 0, %s398
    %s415 = sphi 0, %s399
    %s421 = sphi 0, %s423
    %s424 = sphi 0, %s421
    %s425 = sphi 0, %s424
    %s441 = sphi 0, %s425
    %s445 = sphi 0, %s445
    %s447 = sphi 0, %s445
    %s448 = sphi 0, %s447
    %s462 = sphi 0, %s448
    %s466 = sphi 0, %s466
    %s468 = sphi 0, %s466
    %s469 = sphi 0, %s468
    %s483 = sphi 0, %s469
    %s489 = sphi 0, %s491
    %s492 = sphi 0, %s489
    %s493 = sphi 0, %s492
    %s509 = sphi 0, %s493
  $region4: #{vit_forward.1} parent=0 // loop_header_branch
    %27 = sbr.rel (%p25) target = $region8
  $region5: #{vit_forward.1} parent=0 // loop_body
    %s29 = ssub.s32 %s24, 1
    %s30 = ssub.s32 %s24, 2
    %s37 = sadd.s32 1, %s32
    %p38 = scmp.ge.s32.totalorder %s37, 2
    %s39 = scalar_select %p38, 0, %s37
    %s40 = sadd.s32 1, %s31
    %s41 = scalar_select %p38, %s40, %s31
    %p42 = scmp.ge.s32.totalorder %s41, 2
    %s43 = scalar_select %p42, 0, %s41
    %s44 = ssub.s32 %s31, %s43
    %p45 = scmp.eq.s32.totalorder %s44, 0
    %s47 = sadd.s32 %s46, 1
    %s48 = scalar_select %p45, %s46, %s47
    %p51 = pneg %p45
    %p52 = scmp.eq.s32.totalorder %s24, 3
    %p53 = por %p51, %p52
    %p54 = scmp.ne.s32.totalorder %s46, %s49
    %p55 = scmp.eq.s32.totalorder %s24, 0
    %p56 = por %p54, %p55
    %p57 = scmp.ne.s32.totalorder %s46, %s49
    %p58 = scmp.eq.s32.totalorder %s29, 3
    %p59 = por %p57, %p58
    %p60 = scmp.ne.s32.totalorder %s49, %s50
    %p61 = scmp.eq.s32.totalorder %s29, 0
    %p62 = por %p60, %p61
    %p63 = scmp.ne.s32.totalorder %s49, %s50
    %p64 = scmp.eq.s32.totalorder %s30, 3
    %p65 = por %p63, %p64
    %p67 = scmp.ne.s32.totalorder %s50, %s66
    %p68 = scmp.eq.s32.totalorder %s30, 0
    %p69 = por %p67, %p68
    %s71 = sadd.s32 %s70, 1
    %p74 = scmp.eq.s32.totalorder %s24, 3
    %p75 = scmp.ne.s32.totalorder %s70, %s72
    %p76 = scmp.eq.s32.totalorder %s24, 0
    %p77 = por %p75, %p76
    %p78 = scmp.ne.s32.totalorder %s70, %s72
    %p79 = scmp.eq.s32.totalorder %s29, 3
    %p80 = por %p78, %p79
    %p81 = scmp.ne.s32.totalorder %s72, %s73
    %p82 = scmp.eq.s32.totalorder %s29, 0
    %p83 = por %p81, %p82
    %p84 = scmp.ne.s32.totalorder %s72, %s73
    %p85 = scmp.eq.s32.totalorder %s30, 3
    %p86 = por %p84, %p85
    %p88 = scmp.ne.s32.totalorder %s73, %s87
    %p89 = scmp.eq.s32.totalorder %s30, 0
    %p90 = por %p88, %p89
    %s92 = sadd.s32 %s91, 1
    %p95 = scmp.eq.s32.totalorder %s24, 3
    %p96 = scmp.ne.s32.totalorder %s91, %s93
    %p97 = scmp.eq.s32.totalorder %s24, 0
    %p98 = por %p96, %p97
    %p99 = scmp.ne.s32.totalorder %s91, %s93
    %p100 = scmp.eq.s32.totalorder %s29, 3
    %p101 = por %p99, %p100
    %p102 = scmp.ne.s32.totalorder %s93, %s94
    %p103 = scmp.eq.s32.totalorder %s29, 0
    %p104 = por %p102, %p103
    %p105 = scmp.ne.s32.totalorder %s93, %s94
    %p106 = scmp.eq.s32.totalorder %s30, 3
    %p107 = por %p105, %p106
    %p109 = scmp.ne.s32.totalorder %s94, %s108
    %p110 = scmp.eq.s32.totalorder %s30, 0
    %p111 = por %p109, %p110
    %s113 = sadd.s32 %s112, 1
    %p116 = scmp.eq.s32.totalorder %s24, 3
    %p117 = scmp.ne.s32.totalorder %s112, %s114
    %p118 = scmp.eq.s32.totalorder %s24, 0
    %p119 = por %p117, %p118
    %p120 = scmp.ne.s32.totalorder %s112, %s114
    %p121 = scmp.eq.s32.totalorder %s29, 3
    %p122 = por %p120, %p121
    %p123 = scmp.ne.s32.totalorder %s114, %s115
    %p124 = scmp.eq.s32.totalorder %s29, 0
    %p125 = por %p123, %p124
    %p126 = scmp.ne.s32.totalorder %s114, %s115
    %p127 = scmp.eq.s32.totalorder %s30, 3
    %p128 = por %p126, %p127
    %p130 = scmp.ne.s32.totalorder %s115, %s129
    %p131 = scmp.eq.s32.totalorder %s30, 0
    %p132 = por %p130, %p131
    %s133 = ssub.s32 %s32, %s39
    %p134 = scmp.eq.s32.totalorder %s133, 0
    %s136 = sadd.s32 %s135, 1
    %s137 = scalar_select %p134, %s135, %s136
    %p140 = pneg %p134
    %p141 = scmp.eq.s32.totalorder %s24, 3
    %p142 = por %p140, %p141
    %p143 = scmp.ne.s32.totalorder %s135, %s138
    %p144 = scmp.eq.s32.totalorder %s24, 0
    %p145 = por %p143, %p144
    %p146 = scmp.ne.s32.totalorder %s135, %s138
    %p147 = scmp.eq.s32.totalorder %s29, 3
    %p148 = por %p146, %p147
    %p149 = scmp.ne.s32.totalorder %s138, %s139
    %p150 = scmp.eq.s32.totalorder %s29, 0
    %p151 = por %p149, %p150
    %p152 = scmp.ne.s32.totalorder %s138, %s139
    %p153 = scmp.eq.s32.totalorder %s30, 3
    %p154 = por %p152, %p153
    %p156 = scmp.ne.s32.totalorder %s139, %s155
    %p157 = scmp.eq.s32.totalorder %s30, 0
    %p158 = por %p156, %p157
    %s159 = ssub.s32 %s32, %s39
    %p160 = scmp.eq.s32.totalorder %s159, 0
    %s162 = sadd.s32 %s161, 1
    %s163 = scalar_select %p160, %s161, %s162
    %p166 = pneg %p160
    %p167 = scmp.eq.s32.totalorder %s24, 3
    %p168 = por %p166, %p167
    %p169 = scmp.ne.s32.totalorder %s161, %s164
    %p170 = scmp.eq.s32.totalorder %s24, 0
    %p171 = por %p169, %p170
    %p172 = scmp.ne.s32.totalorder %s161, %s164
    %p173 = scmp.eq.s32.totalorder %s29, 3
    %p174 = por %p172, %p173
    %p175 = scmp.ne.s32.totalorder %s164, %s165
    %p176 = scmp.eq.s32.totalorder %s29, 0
    %p177 = por %p175, %p176
    %p178 = scmp.ne.s32.totalorder %s164, %s165
    %p179 = scmp.eq.s32.totalorder %s30, 3
    %p180 = por %p178, %p179
    %p182 = scmp.ne.s32.totalorder %s165, %s181
    %p183 = scmp.eq.s32.totalorder %s30, 0
    %p184 = por %p182, %p183
    %s185 = ssub.s32 %s32, %s39
    %p186 = scmp.eq.s32.totalorder %s185, 0
    %s188 = sadd.s32 %s187, 1
    %s189 = scalar_select %p186, %s187, %s188
    %p192 = pneg %p186
    %p193 = scmp.eq.s32.totalorder %s24, 3
    %p194 = por %p192, %p193
    %p195 = scmp.ne.s32.totalorder %s187, %s190
    %p196 = scmp.eq.s32.totalorder %s24, 0
    %p197 = por %p195, %p196
    %p198 = scmp.ne.s32.totalorder %s187, %s190
    %p199 = scmp.eq.s32.totalorder %s29, 3
    %p200 = por %p198, %p199
    %p201 = scmp.ne.s32.totalorder %s190, %s191
    %p202 = scmp.eq.s32.totalorder %s29, 0
    %p203 = por %p201, %p202
    %p204 = scmp.ne.s32.totalorder %s190, %s191
    %p205 = scmp.eq.s32.totalorder %s30, 3
    %p206 = por %p204, %p205
    %p208 = scmp.ne.s32.totalorder %s191, %s207
    %p209 = scmp.eq.s32.totalorder %s30, 0
    %p210 = por %p208, %p209
    %s211 = ssub.s32 %s32, %s39
    %p212 = scmp.eq.s32.totalorder %s211, 0
    %s214 = sadd.s32 %s213, 1
    %s215 = scalar_select %p212, %s213, %s214
    %p218 = pneg %p212
    %p219 = scmp.eq.s32.totalorder %s24, 3
    %p220 = por %p218, %p219
    %p221 = scmp.ne.s32.totalorder %s213, %s216
    %p222 = scmp.eq.s32.totalorder %s24, 0
    %p223 = por %p221, %p222
    %p224 = scmp.ne.s32.totalorder %s213, %s216
    %p225 = scmp.eq.s32.totalorder %s29, 3
    %p226 = por %p224, %p225
    %p227 = scmp.ne.s32.totalorder %s216, %s217
    %p228 = scmp.eq.s32.totalorder %s29, 0
    %p229 = por %p227, %p228
    %p230 = scmp.ne.s32.totalorder %s216, %s217
    %p231 = scmp.eq.s32.totalorder %s30, 3
    %p232 = por %p230, %p231
    %p234 = scmp.ne.s32.totalorder %s217, %s233
    %p235 = scmp.eq.s32.totalorder %s30, 0
    %p236 = por %p234, %p235
    %s237 = ssub.s32 %s32, %s39
    %p238 = scmp.eq.s32.totalorder %s237, 0
    %s240 = sadd.s32 %s239, 1
    %s241 = scalar_select %p238, %s239, %s240
    %p244 = pneg %p238
    %p245 = scmp.eq.s32.totalorder %s24, 3
    %p246 = por %p244, %p245
    %p247 = scmp.ne.s32.totalorder %s239, %s242
    %p248 = scmp.eq.s32.totalorder %s24, 0
    %p249 = por %p247, %p248
    %p250 = scmp.ne.s32.totalorder %s239, %s242
    %p251 = scmp.eq.s32.totalorder %s29, 3
    %p252 = por %p250, %p251
    %p253 = scmp.ne.s32.totalorder %s242, %s243
    %p254 = scmp.eq.s32.totalorder %s29, 0
    %p255 = por %p253, %p254
    %p256 = scmp.ne.s32.totalorder %s242, %s243
    %p257 = scmp.eq.s32.totalorder %s30, 3
    %p258 = por %p256, %p257
    %p260 = scmp.ne.s32.totalorder %s243, %s259
    %p261 = scmp.eq.s32.totalorder %s30, 0
    %p262 = por %p260, %p261
    %s263 = ssub.s32 %s32, %s39
    %p264 = scmp.eq.s32.totalorder %s263, 0
    %s266 = sadd.s32 %s265, 1
    %s267 = scalar_select %p264, %s265, %s266
    %p270 = pneg %p264
    %p271 = scmp.eq.s32.totalorder %s24, 3
    %p272 = por %p270, %p271
    %p273 = scmp.ne.s32.totalorder %s265, %s268
    %p274 = scmp.eq.s32.totalorder %s24, 0
    %p275 = por %p273, %p274
    %p276 = scmp.ne.s32.totalorder %s265, %s268
    %p277 = scmp.eq.s32.totalorder %s29, 3
    %p278 = por %p276, %p277
    %p279 = scmp.ne.s32.totalorder %s268, %s269
    %p280 = scmp.eq.s32.totalorder %s29, 0
    %p281 = por %p279, %p280
    %p282 = scmp.ne.s32.totalorder %s268, %s269
    %p283 = scmp.eq.s32.totalorder %s30, 3
    %p284 = por %p282, %p283
    %p286 = scmp.ne.s32.totalorder %s269, %s285
    %p287 = scmp.eq.s32.totalorder %s30, 0
    %p288 = por %p286, %p287
    %s289 = ssub.s32 %s32, %s39
    %p290 = scmp.eq.s32.totalorder %s289, 0
    %s292 = sadd.s32 %s291, 1
    %s293 = scalar_select %p290, %s291, %s292
    %p296 = pneg %p290
    %p297 = scmp.eq.s32.totalorder %s24, 3
    %p298 = por %p296, %p297
    %p299 = scmp.ne.s32.totalorder %s291, %s294
    %p300 = scmp.eq.s32.totalorder %s24, 0
    %p301 = por %p299, %p300
    %p302 = scmp.ne.s32.totalorder %s291, %s294
    %p303 = scmp.eq.s32.totalorder %s29, 3
    %p304 = por %p302, %p303
    %p305 = scmp.ne.s32.totalorder %s294, %s295
    %p306 = scmp.eq.s32.totalorder %s29, 0
    %p307 = por %p305, %p306
    %p308 = scmp.ne.s32.totalorder %s294, %s295
    %p309 = scmp.eq.s32.totalorder %s30, 3
    %p310 = por %p308, %p309
    %p312 = scmp.ne.s32.totalorder %s295, %s311
    %p313 = scmp.eq.s32.totalorder %s30, 0
    %p314 = por %p312, %p313
    %s315 = ssub.s32 %s32, %s39
    %p316 = scmp.eq.s32.totalorder %s315, 0
    %s318 = sadd.s32 %s317, 1
    %s319 = scalar_select %p316, %s317, %s318
    %p322 = pneg %p316
    %p323 = scmp.eq.s32.totalorder %s24, 3
    %p324 = por %p322, %p323
    %p325 = scmp.ne.s32.totalorder %s317, %s320
    %p326 = scmp.eq.s32.totalorder %s24, 0
    %p327 = por %p325, %p326
    %p328 = scmp.ne.s32.totalorder %s317, %s320
    %p329 = scmp.eq.s32.totalorder %s29, 3
    %p330 = por %p328, %p329
    %p331 = scmp.ne.s32.totalorder %s320, %s321
    %p332 = scmp.eq.s32.totalorder %s29, 0
    %p333 = por %p331, %p332
    %p334 = scmp.ne.s32.totalorder %s320, %s321
    %p335 = scmp.eq.s32.totalorder %s30, 3
    %p336 = por %p334, %p335
    %p338 = scmp.ne.s32.totalorder %s321, %s337
    %p339 = scmp.eq.s32.totalorder %s30, 0
    %p340 = por %p338, %p339
    %s341 = ssub.s32 %s32, %s39
    %p342 = scmp.eq.s32.totalorder %s341, 0
    %s344 = sadd.s32 %s343, 1
    %s345 = scalar_select %p342, %s343, %s344
    %p348 = pneg %p342
    %p349 = scmp.eq.s32.totalorder %s24, 3
    %p350 = por %p348, %p349
    %p351 = scmp.ne.s32.totalorder %s343, %s346
    %p352 = scmp.eq.s32.totalorder %s24, 0
    %p353 = por %p351, %p352
    %p354 = scmp.ne.s32.totalorder %s343, %s346
    %p355 = scmp.eq.s32.totalorder %s29, 3
    %p356 = por %p354, %p355
    %p357 = scmp.ne.s32.totalorder %s346, %s347
    %p358 = scmp.eq.s32.totalorder %s29, 0
    %p359 = por %p357, %p358
    %p360 = scmp.ne.s32.totalorder %s346, %s347
    %p361 = scmp.eq.s32.totalorder %s30, 3
    %p362 = por %p360, %p361
    %p364 = scmp.ne.s32.totalorder %s347, %s363
    %p365 = scmp.eq.s32.totalorder %s30, 0
    %p366 = por %p364, %p365
    %s367 = ssub.s32 %s32, %s39
    %p368 = scmp.eq.s32.totalorder %s367, 0
    %s370 = sadd.s32 %s369, 1
    %s371 = scalar_select %p368, %s369, %s370
    %p374 = pneg %p368
    %p375 = scmp.eq.s32.totalorder %s24, 3
    %p376 = por %p374, %p375
    %p377 = scmp.ne.s32.totalorder %s369, %s372
    %p378 = scmp.eq.s32.totalorder %s24, 0
    %p379 = por %p377, %p378
    %p380 = scmp.ne.s32.totalorder %s369, %s372
    %p381 = scmp.eq.s32.totalorder %s29, 3
    %p382 = por %p380, %p381
    %p383 = scmp.ne.s32.totalorder %s372, %s373
    %p384 = scmp.eq.s32.totalorder %s29, 0
    %p385 = por %p383, %p384
    %p386 = scmp.ne.s32.totalorder %s372, %s373
    %p387 = scmp.eq.s32.totalorder %s30, 3
    %p388 = por %p386, %p387
    %p390 = scmp.ne.s32.totalorder %s373, %s389
    %p391 = scmp.eq.s32.totalorder %s30, 0
    %p392 = por %p390, %p391
    %s393 = ssub.s32 %s32, %s39
    %p394 = scmp.eq.s32.totalorder %s393, 0
    %s396 = sadd.s32 %s395, 1
    %s397 = scalar_select %p394, %s395, %s396
    %p400 = pneg %p394
    %p401 = scmp.eq.s32.totalorder %s24, 3
    %p402 = por %p400, %p401
    %p403 = scmp.ne.s32.totalorder %s395, %s398
    %p404 = scmp.eq.s32.totalorder %s24, 0
    %p405 = por %p403, %p404
    %p406 = scmp.ne.s32.totalorder %s395, %s398
    %p407 = scmp.eq.s32.totalorder %s29, 3
    %p408 = por %p406, %p407
    %p409 = scmp.ne.s32.totalorder %s398, %s399
    %p410 = scmp.eq.s32.totalorder %s29, 0
    %p411 = por %p409, %p410
    %p412 = scmp.ne.s32.totalorder %s398, %s399
    %p413 = scmp.eq.s32.totalorder %s30, 3
    %p414 = por %p412, %p413
    %p416 = scmp.ne.s32.totalorder %s399, %s415
    %p417 = scmp.eq.s32.totalorder %s30, 0
    %p418 = por %p416, %p417
    %s419 = ssub.s32 %s32, %s39
    %p420 = scmp.eq.s32.totalorder %s419, 0
    %s422 = sadd.s32 %s421, 1
    %s423 = scalar_select %p420, %s421, %s422
    %p426 = pneg %p420
    %p427 = scmp.eq.s32.totalorder %s24, 3
    %p428 = por %p426, %p427
    %p429 = scmp.ne.s32.totalorder %s421, %s424
    %p430 = scmp.eq.s32.totalorder %s24, 0
    %p431 = por %p429, %p430
    %p432 = scmp.ne.s32.totalorder %s421, %s424
    %p433 = scmp.eq.s32.totalorder %s29, 3
    %p434 = por %p432, %p433
    %p435 = scmp.ne.s32.totalorder %s424, %s425
    %p436 = scmp.eq.s32.totalorder %s29, 0
    %p437 = por %p435, %p436
    %p438 = scmp.ne.s32.totalorder %s424, %s425
    %p439 = scmp.eq.s32.totalorder %s30, 3
    %p440 = por %p438, %p439
    %p442 = scmp.ne.s32.totalorder %s425, %s441
    %p443 = scmp.eq.s32.totalorder %s30, 0
    %p444 = por %p442, %p443
    %s446 = sadd.s32 %s445, 1
    %p449 = scmp.eq.s32.totalorder %s24, 3
    %p450 = scmp.ne.s32.totalorder %s445, %s447
    %p451 = scmp.eq.s32.totalorder %s24, 0
    %p452 = por %p450, %p451
    %p453 = scmp.ne.s32.totalorder %s445, %s447
    %p454 = scmp.eq.s32.totalorder %s29, 3
    %p455 = por %p453, %p454
    %p456 = scmp.ne.s32.totalorder %s447, %s448
    %p457 = scmp.eq.s32.totalorder %s29, 0
    %p458 = por %p456, %p457
    %p459 = scmp.ne.s32.totalorder %s447, %s448
    %p460 = scmp.eq.s32.totalorder %s30, 3
    %p461 = por %p459, %p460
    %p463 = scmp.ne.s32.totalorder %s448, %s462
    %p464 = scmp.eq.s32.totalorder %s30, 0
    %p465 = por %p463, %p464
    %s467 = sadd.s32 %s466, 1
    %p470 = scmp.eq.s32.totalorder %s24, 3
    %p471 = scmp.ne.s32.totalorder %s466, %s468
    %p472 = scmp.eq.s32.totalorder %s24, 0
    %p473 = por %p471, %p472
    %p474 = scmp.ne.s32.totalorder %s466, %s468
    %p475 = scmp.eq.s32.totalorder %s29, 3
    %p476 = por %p474, %p475
    %p477 = scmp.ne.s32.totalorder %s468, %s469
    %p478 = scmp.eq.s32.totalorder %s29, 0
    %p479 = por %p477, %p478
    %p480 = scmp.ne.s32.totalorder %s468, %s469
    %p481 = scmp.eq.s32.totalorder %s30, 3
    %p482 = por %p480, %p481
    %p484 = scmp.ne.s32.totalorder %s469, %s483
    %p485 = scmp.eq.s32.totalorder %s30, 0
    %p486 = por %p484, %p485
    %s487 = ssub.s32 %s31, %s43
    %p488 = scmp.eq.s32.totalorder %s487, 0
    %s490 = sadd.s32 %s489, 1
    %s491 = scalar_select %p488, %s489, %s490
    %p494 = pneg %p488
    %p495 = scmp.eq.s32.totalorder %s24, 3
    %p496 = por %p494, %p495
    %p497 = scmp.ne.s32.totalorder %s489, %s492
    %p498 = scmp.eq.s32.totalorder %s24, 0
    %p499 = por %p497, %p498
    %p500 = scmp.ne.s32.totalorder %s489, %s492
    %p501 = scmp.eq.s32.totalorder %s29, 3
    %p502 = por %p500, %p501
    %p503 = scmp.ne.s32.totalorder %s492, %s493
    %p504 = scmp.eq.s32.totalorder %s29, 0
    %p505 = por %p503, %p504
    %p506 = scmp.ne.s32.totalorder %s492, %s493
    %p507 = scmp.eq.s32.totalorder %s30, 3
    %p508 = por %p506, %p507
    %p510 = scmp.ne.s32.totalorder %s493, %s509
    %p511 = scmp.eq.s32.totalorder %s30, 0
    %p512 = por %p510, %p511
    %p513 = scmp.le.s32.totalorder 1, %s24
    %p514 = scmp.lt.s32.totalorder %s24, 5
    %p515 = pnand %p513, %p514
    %p516 = pneg %p515
    // Predicated region
    $region9: #{vit_forward.1} parent=5 // pred_check
      _
    $region10: #{vit_forward.1} parent=5 // pred_check_branch
      %518 = sbr.rel (%p515) target = $region12
    $region11: #{vit_forward.1} parent=5 // pred_region
      %s519 = ssub.s32 %s24, 1
      // Predicated region
      $region13: #{vit_forward.1} parent=11 // pred_check
        %p520 = pneg %p83
      $region14: #{vit_forward.1} parent=11 // pred_check_branch
        %522 = sbr.rel (%p520) target = $region16
      $region15: #{vit_forward.1} parent=11 // pred_region
        _
      $region16: #{vit_forward.1} parent=11 // pred_fallthru
        _
      // Predicated region
      $region17: #{vit_forward.1} parent=11 // pred_check
        %p523 = pneg %p104
      $region18: #{vit_forward.1} parent=11 // pred_check_branch
        %525 = sbr.rel (%p523) target = $region20
      $region19: #{vit_forward.1} parent=11 // pred_region
        _
      $region20: #{vit_forward.1} parent=11 // pred_fallthru
        _
      // Predicated region
      $region21: #{vit_forward.1} parent=11 // pred_check
        %p526 = pneg %p125
      $region22: #{vit_forward.1} parent=11 // pred_check_branch
        %528 = sbr.rel (%p526) target = $region24
      $region23: #{vit_forward.1} parent=11 // pred_region
        _
      $region24: #{vit_forward.1} parent=11 // pred_fallthru
        _
      // Predicated region
      $region25: #{vit_forward.1} parent=11 // pred_check
        %p529 = pneg %p458
      $region26: #{vit_forward.1} parent=11 // pred_check_branch
        %531 = sbr.rel (%p529) target = $region28
      $region27: #{vit_forward.1} parent=11 // pred_region
        _
      $region28: #{vit_forward.1} parent=11 // pred_fallthru
        _
      // Predicated region
      $region29: #{vit_forward.1} parent=11 // pred_check
        %p532 = pneg %p479
      $region30: #{vit_forward.1} parent=11 // pred_check_branch
        %534 = sbr.rel (%p532) target = $region32
      $region31: #{vit_forward.1} parent=11 // pred_region
        _
      $region32: #{vit_forward.1} parent=11 // pred_fallthru
        _
    $region12: #{vit_forward.1} parent=5 // pred_fallthru
      _
    %p535 = scmp.lt.s32.totalorder %s24, 4
    // Predicated region
    $region33: #{vit_forward.1} parent=5 // pred_check
      %p536 = pneg %p535
    $region34: #{vit_forward.1} parent=5 // pred_check_branch
      %538 = sbr.rel (%p536) target = $region36
    $region35: #{vit_forward.1} parent=5 // pred_region
      // Predicated region
      $region37: #{vit_forward.1} parent=35 // pred_check
        %p539 = pneg %p56
      $region38: #{vit_forward.1} parent=35 // pred_check_branch
        %541 = sbr.rel (%p539) target = $region40
      $region39: #{vit_forward.1} parent=35 // pred_region
        %p542 = scmp.lt.s32.totalorder %s31, 1
        %s543 = scalar_select %p542, %s31, 1
        %s544 = smul.addr %s543, 2
        %s545 = smul.addr %s544, 8
        %s546 = scalar_lea.vmem %s0, %s545
      $region40: #{vit_forward.1} parent=35 // pred_fallthru
        _
      // Predicated region
      $region41: #{vit_forward.1} parent=35 // pred_check
        %p547 = pneg %p145
      $region42: #{vit_forward.1} parent=35 // pred_check_branch
        %549 = sbr.rel (%p547) target = $region44
      $region43: #{vit_forward.1} parent=35 // pred_region
        %p550 = scmp.lt.s32.totalorder %s32, 1
        %s551 = scalar_select %p550, %s32, 1
        %s552 = scalar_lea.vmem %s4, %s551
      $region44: #{vit_forward.1} parent=35 // pred_fallthru
        _
      // Predicated region
      $region45: #{vit_forward.1} parent=35 // pred_check
        %p553 = pneg %p171
      $region46: #{vit_forward.1} parent=35 // pred_check_branch
        %555 = sbr.rel (%p553) target = $region48
      $region47: #{vit_forward.1} parent=35 // pred_region
        %p556 = scmp.lt.s32.totalorder %s32, 1
        %s557 = scalar_select %p556, %s32, 1
        %s558 = scalar_lea.vmem %s5, %s557
      $region48: #{vit_forward.1} parent=35 // pred_fallthru
        _
      // Predicated region
      $region49: #{vit_forward.1} parent=35 // pred_check
        %p559 = pneg %p197
      $region50: #{vit_forward.1} parent=35 // pred_check_branch
        %561 = sbr.rel (%p559) target = $region52
      $region51: #{vit_forward.1} parent=35 // pred_region
        %p562 = scmp.lt.s32.totalorder %s32, 1
        %s563 = scalar_select %p562, %s32, 1
        %s564 = smul.addr %s563, 48
        %s565 = smul.addr %s564, 4
        %s566 = scalar_lea.vmem %s6, %s565
      $region52: #{vit_forward.1} parent=35 // pred_fallthru
        _
      // Predicated region
      $region53: #{vit_forward.1} parent=35 // pred_check
        %p567 = pneg %p223
      $region54: #{vit_forward.1} parent=35 // pred_check_branch
        %569 = sbr.rel (%p567) target = $region56
      $region55: #{vit_forward.1} parent=35 // pred_region
        %p570 = scmp.lt.s32.totalorder %s32, 1
        %s571 = scalar_select %p570, %s32, 1
        %s572 = smul.addr %s571, 3
        %s573 = scalar_lea.vmem %s7, %s572
      $region56: #{vit_forward.1} parent=35 // pred_fallthru
        _
      // Predicated region
      $region57: #{vit_forward.1} parent=35 // pred_check
        %p574 = pneg %p249
      $region58: #{vit_forward.1} parent=35 // pred_check_branch
        %576 = sbr.rel (%p574) target = $region60
      $region59: #{vit_forward.1} parent=35 // pred_region
        %p577 = scmp.lt.s32.totalorder %s32, 1
        %s578 = scalar_select %p577, %s32, 1
        %s579 = smul.addr %s578, 16
        %s580 = smul.addr %s579, 4
        %s581 = scalar_lea.vmem %s8, %s580
      $region60: #{vit_forward.1} parent=35 // pred_fallthru
        _
      // Predicated region
      $region61: #{vit_forward.1} parent=35 // pred_check
        %p582 = pneg %p275
      $region62: #{vit_forward.1} parent=35 // pred_check_branch
        %584 = sbr.rel (%p582) target = $region64
      $region63: #{vit_forward.1} parent=35 // pred_region
        %p585 = scmp.lt.s32.totalorder %s32, 1
        %s586 = scalar_select %p585, %s32, 1
        %s587 = scalar_lea.vmem %s9, %s586
      $region64: #{vit_forward.1} parent=35 // pred_fallthru
        _
      // Predicated region
      $region65: #{vit_forward.1} parent=35 // pred_check
        %p588 = pneg %p301
      $region66: #{vit_forward.1} parent=35 // pred_check_branch
        %590 = sbr.rel (%p588) target = $region68
      $region67: #{vit_forward.1} parent=35 // pred_region
        %p591 = scmp.lt.s32.totalorder %s32, 1
        %s592 = scalar_select %p591, %s32, 1
        %s593 = scalar_lea.vmem %s10, %s592
      $region68: #{vit_forward.1} parent=35 // pred_fallthru
        _
      // Predicated region
      $region69: #{vit_forward.1} parent=35 // pred_check
        %p594 = pneg %p327
      $region70: #{vit_forward.1} parent=35 // pred_check_branch
        %596 = sbr.rel (%p594) target = $region72
      $region71: #{vit_forward.1} parent=35 // pred_region
        %p597 = scmp.lt.s32.totalorder %s32, 1
        %s598 = scalar_select %p597, %s32, 1
        %s599 = scalar_lea.vmem %s11, %s598
      $region72: #{vit_forward.1} parent=35 // pred_fallthru
        _
      // Predicated region
      $region73: #{vit_forward.1} parent=35 // pred_check
        %p600 = pneg %p353
      $region74: #{vit_forward.1} parent=35 // pred_check_branch
        %602 = sbr.rel (%p600) target = $region76
      $region75: #{vit_forward.1} parent=35 // pred_region
        %p603 = scmp.lt.s32.totalorder %s32, 1
        %s604 = scalar_select %p603, %s32, 1
        %s605 = smul.addr %s604, 32
        %s606 = smul.addr %s605, 4
        %s607 = scalar_lea.vmem %s12, %s606
      $region76: #{vit_forward.1} parent=35 // pred_fallthru
        _
      // Predicated region
      $region77: #{vit_forward.1} parent=35 // pred_check
        %p608 = pneg %p379
      $region78: #{vit_forward.1} parent=35 // pred_check_branch
        %610 = sbr.rel (%p608) target = $region80
      $region79: #{vit_forward.1} parent=35 // pred_region
        %p611 = scmp.lt.s32.totalorder %s32, 1
        %s612 = scalar_select %p611, %s32, 1
        %s613 = smul.addr %s612, 2
        %s614 = scalar_lea.vmem %s13, %s613
      $region80: #{vit_forward.1} parent=35 // pred_fallthru
        _
      // Predicated region
      $region81: #{vit_forward.1} parent=35 // pred_check
        %p615 = pneg %p405
      $region82: #{vit_forward.1} parent=35 // pred_check_branch
        %617 = sbr.rel (%p615) target = $region84
      $region83: #{vit_forward.1} parent=35 // pred_region
        %p618 = scmp.lt.s32.totalorder %s32, 1
        %s619 = scalar_select %p618, %s32, 1
        %s620 = smul.addr %s619, 32
        %s621 = smul.addr %s620, 4
        %s622 = scalar_lea.vmem %s14, %s621
      $region84: #{vit_forward.1} parent=35 // pred_fallthru
        _
      // Predicated region
      $region85: #{vit_forward.1} parent=35 // pred_check
        %p623 = pneg %p431
      $region86: #{vit_forward.1} parent=35 // pred_check_branch
        %625 = sbr.rel (%p623) target = $region88
      $region87: #{vit_forward.1} parent=35 // pred_region
        %p626 = scmp.lt.s32.totalorder %s32, 1
        %s627 = scalar_select %p626, %s32, 1
        %s628 = scalar_lea.vmem %s15, %s627
      $region88: #{vit_forward.1} parent=35 // pred_fallthru
        _
    $region36: #{vit_forward.1} parent=5 // pred_fallthru
      _
    %p629 = scmp.le.s32.totalorder 1, %s24
    %p630 = scmp.lt.s32.totalorder %s24, 5
    %p631 = pnand %p629, %p630
    %p632 = pneg %p631
    // Predicated region
    $region89: #{vit_forward.1} parent=5 // pred_check
      _
    $region90: #{vit_forward.1} parent=5 // pred_check_branch
      %634 = sbr.rel (%p631) target = $region92
    $region91: #{vit_forward.1} parent=5 // pred_region
      %s635 = ssub.s32 %s24, 1
      %p636 = scmp.lt.s32.totalorder %s33, 1
      %s637 = scalar_select %p636, %s33, 1
      %s638 = smul.addr %s637, 2
      %s639 = smul.addr %s638, 8
      %s640 = scalar_lea.vmem %s0, %s639
      %p641 = pneg %p62
      %p642 = pneg %p59
      %p643 = pneg %p83
      %p644 = pneg %p80
      %p645 = pneg %p104
      %p646 = pneg %p101
      %p647 = pneg %p125
      %p648 = pneg %p122
      %p649 = scmp.lt.s32.totalorder %s34, 1
      %s650 = scalar_select %p649, %s34, 1
      %s651 = scalar_lea.vmem %s4, %s650
      %p652 = pneg %p151
      %p653 = pneg %p148
      %p654 = scmp.lt.s32.totalorder %s34, 1
      %s655 = scalar_select %p654, %s34, 1
      %s656 = scalar_lea.vmem %s5, %s655
      %p657 = pneg %p177
      %p658 = pneg %p174
      %p659 = scmp.lt.s32.totalorder %s34, 1
      %s660 = scalar_select %p659, %s34, 1
      %s661 = smul.addr %s660, 48
      %s662 = smul.addr %s661, 4
      %s663 = scalar_lea.vmem %s6, %s662
      %p664 = pneg %p203
      %p665 = pneg %p200
      %p666 = scmp.lt.s32.totalorder %s34, 1
      %s667 = scalar_select %p666, %s34, 1
      %s668 = smul.addr %s667, 3
      %s669 = scalar_lea.vmem %s7, %s668
      %p670 = pneg %p229
      %p671 = pneg %p226
      %p672 = scmp.lt.s32.totalorder %s34, 1
      %s673 = scalar_select %p672, %s34, 1
      %s674 = smul.addr %s673, 16
      %s675 = smul.addr %s674, 4
      %s676 = scalar_lea.vmem %s8, %s675
      %p677 = pneg %p255
      %p678 = pneg %p252
      %p679 = scmp.lt.s32.totalorder %s34, 1
      %s680 = scalar_select %p679, %s34, 1
      %s681 = scalar_lea.vmem %s9, %s680
      %p682 = pneg %p281
      %p683 = pneg %p278
      %p684 = scmp.lt.s32.totalorder %s34, 1
      %s685 = scalar_select %p684, %s34, 1
      %s686 = scalar_lea.vmem %s10, %s685
      %p687 = pneg %p307
      %p688 = pneg %p304
      %p689 = scmp.lt.s32.totalorder %s34, 1
      %s690 = scalar_select %p689, %s34, 1
      %s691 = scalar_lea.vmem %s11, %s690
      %p692 = pneg %p333
      %p693 = pneg %p330
      %p694 = scmp.lt.s32.totalorder %s34, 1
      %s695 = scalar_select %p694, %s34, 1
      %s696 = smul.addr %s695, 32
      %s697 = smul.addr %s696, 4
      %s698 = scalar_lea.vmem %s12, %s697
      %p699 = pneg %p359
      %p700 = pneg %p356
      %p701 = scmp.lt.s32.totalorder %s34, 1
      %s702 = scalar_select %p701, %s34, 1
      %s703 = smul.addr %s702, 2
      %s704 = scalar_lea.vmem %s13, %s703
      %p705 = pneg %p385
      %p706 = pneg %p382
      %p707 = scmp.lt.s32.totalorder %s34, 1
      %s708 = scalar_select %p707, %s34, 1
      %s709 = smul.addr %s708, 32
      %s710 = smul.addr %s709, 4
      %s711 = scalar_lea.vmem %s14, %s710
      %p712 = pneg %p411
      %p713 = pneg %p408
      %p714 = scmp.lt.s32.totalorder %s34, 1
      %s715 = scalar_select %p714, %s34, 1
      %s716 = scalar_lea.vmem %s15, %s715
      %p717 = pneg %p437
      %p718 = pneg %p434
      %p719 = pneg %p458
      %p720 = pneg %p455
      %p721 = pneg %p479
      %p722 = pneg %p476
      %p723 = pneg %p505
      %p724 = pneg %p502
      %p725 = scmp.lt.s32.totalorder %s33, 1
      %s726 = scalar_select %p725, %s33, 1
      %s727 = smul.addr %s726, 2
      %s728 = smul.addr %s727, 8
      %s729 = scalar_lea.vmem %s18, %s728
      %p730 = scmp.lt.s32.totalorder %s33, 1
      %s731 = scalar_select %p730, %s33, 1
      %s732 = smul.addr %s731, 2
      %s733 = smul.addr %s732, 8
      %s734 = scalar_lea.vmem %s0, %s733
      %p735 = scmp.lt.s32.totalorder %s34, 1
      %s736 = scalar_select %p735, %s34, 1
      %s737 = scalar_lea.vmem %s4, %s736
      %p738 = scmp.lt.s32.totalorder %s34, 1
      %s739 = scalar_select %p738, %s34, 1
      %s740 = scalar_lea.vmem %s5, %s739
      %p741 = scmp.lt.s32.totalorder %s34, 1
      %s742 = scalar_select %p741, %s34, 1
      %s743 = smul.addr %s742, 48
      %s744 = smul.addr %s743, 4
      %s745 = scalar_lea.vmem %s6, %s744
      %p746 = scmp.lt.s32.totalorder %s34, 1
      %s747 = scalar_select %p746, %s34, 1
      %s748 = smul.addr %s747, 3
      %s749 = scalar_lea.vmem %s7, %s748
      %p750 = scmp.lt.s32.totalorder %s34, 1
      %s751 = scalar_select %p750, %s34, 1
      %s752 = smul.addr %s751, 16
      %s753 = smul.addr %s752, 4
      %s754 = scalar_lea.vmem %s8, %s753
      %p755 = scmp.lt.s32.totalorder %s34, 1
      %s756 = scalar_select %p755, %s34, 1
      %s757 = scalar_lea.vmem %s9, %s756
      %p758 = scmp.lt.s32.totalorder %s34, 1
      %s759 = scalar_select %p758, %s34, 1
      %s760 = scalar_lea.vmem %s10, %s759
      %p761 = scmp.lt.s32.totalorder %s34, 1
      %s762 = scalar_select %p761, %s34, 1
      %s763 = scalar_lea.vmem %s11, %s762
      %p764 = scmp.lt.s32.totalorder %s34, 1
      %s765 = scalar_select %p764, %s34, 1
      %s766 = smul.addr %s765, 32
      %s767 = smul.addr %s766, 4
      %s768 = scalar_lea.vmem %s12, %s767
      %p769 = scmp.lt.s32.totalorder %s34, 1
      %s770 = scalar_select %p769, %s34, 1
      %s771 = smul.addr %s770, 2
      %s772 = scalar_lea.vmem %s13, %s771
      %p773 = scmp.lt.s32.totalorder %s34, 1
      %s774 = scalar_select %p773, %s34, 1
      %s775 = smul.addr %s774, 32
      %s776 = smul.addr %s775, 4
      %s777 = scalar_lea.vmem %s14, %s776
      %p778 = scmp.lt.s32.totalorder %s34, 1
      %s779 = scalar_select %p778, %s34, 1
      %s780 = scalar_lea.vmem %s15, %s779
      %p781 = scmp.lt.s32.totalorder %s33, 1
      %s782 = scalar_select %p781, %s33, 1
      %s783 = smul.addr %s782, 2
      %s784 = smul.addr %s783, 8
      %s785 = scalar_lea.vmem %s18, %s784
      %p787 = scmp.eq.s32.totalorder %s34, 0
      // Predicated region
      $region93: #{vit_forward.1} parent=91 // pred_check
        %p788 = pneg %p787
      $region94: #{vit_forward.1} parent=91 // pred_check_branch
        %790 = sbr.rel (%p788) target = $region96
      $region95: #{vit_forward.1} parent=91 // pred_region
        %v791 = vld [vmem:[%s734] sm:$0xff]
        %v792 = vld [vmem:[%s734 + $0x8] sm:$0xff]
        %v793 = vpack.c.bf16 %v792, %v791
        %v794 = vld [vmem:[%s1] sm:$0xf]
        %v795 = vld [vmem:[%s1 + $0x4] sm:$0xf]
        %v796 = vld [vmem:[%s1 + $0x8] sm:$0xf]
        %v797 = vld [vmem:[%s1 + $0xc] sm:$0xf]
        %v798 = vld [vmem:[%s1 + $0x10] sm:$0xf]
        %v799 = vld [vmem:[%s1 + $0x14] sm:$0xf]
        %v800 = vld [vmem:[%s1 + $0x18] sm:$0xf]
        %v801 = vld [vmem:[%s1 + $0x1c] sm:$0xf]
        %v802 = vld [vmem:[%s2] sm:$0x1]
        %v804 = vperm.slane %v802, 0
        %v814 = vunpack.c.l.b16 %v794
        %v815 = vunpack.c.l.b16 %v795
        %v816 = vunpack.c.l.b16 %v796
        %v817 = vunpack.c.l.b16 %v797
        %v818 = vunpack.c.l.b16 %v798
        %v819 = vunpack.c.l.b16 %v799
        %v820 = vunpack.c.l.b16 %v800
        %v821 = vunpack.c.l.b16 %v801
        %v822 = vpack.c.b16 %v815, %v814
        %v823 = vpack.c.b16 %v817, %v816
        %v824 = vpack.c.b16 %v819, %v818
        %v825 = vpack.c.b16 %v821, %v820
        %vm830 = vcmask 523264
        %v832 = vsel %vm830, %v793, 0
        %834 = vmatpush.bf16.msra.mxu0 0
        %835 = vmatpush.bf16.msra.mxu0 0
        %836 = vmatpush.bf16.msra.mxu0 0
        %837 = vmatpush.bf16.msra.mxu0 0
        %838 = vmatpush.bf16.msra.mxu0 %v825
        %839 = vmatpush.bf16.msra.mxu0 %v824
        %840 = vmatpush.bf16.msra.mxu0 %v823
        %841 = vmatpush.bf16.msra.mxu0 %v822
        %842 = vmatmul.bf16.gmra.mxu0 %v832
        %v843 = vpop.f32.mrf.mxu0
        %v844 = vadd.f32 %v804, %v843
        %v845 = vpop.f32.mrf.mxu0
        %v846 = vadd.f32 %v804, %v845
        %847 = vdwg.mxu0
        %v848 = vld [vmem:[%s3] sm:$0xff]
        %v849 = vld [vmem:[%s3 + $0x8] sm:$0xff]
        %v850 = vadd.f32 %v844, %v848
        %v851 = vadd.f32 %v846, %v849
        %852 = vst [vmem:[#allocation2] sm:$0xff] %v850
        %853 = vst [vmem:[#allocation2 + $0x8] sm:$0xff] %v851
      $region96: #{vit_forward.1} parent=91 // pred_fallthru
        _
      %v854 = vld [vmem:[#allocation2] sm:$0xff]
      %v855 = vld [vmem:[#allocation2 + $0x8] sm:$0xff]
      %v856 = vld [vmem:[%s737] sm:$0x1]
      %v857 = vld [vmem:[%s740] sm:$0x1]
      %858 = vadd.xlane.f32.xlu0 %v854
      %v859 = vpop.xlane.xlu0 %858
      %860 = vadd.xlane.f32.xlu0 %v855
      %v861 = vpop.xlane.xlu0 %860
      %v862 = vrcp.pop 128.0
      %v863 = vmul.f32 128.0, %v862
      %v864 = vsub.f32 1.0, %v863
      %v865 = vmul.f32 %v862, %v864
      %v866 = vadd.f32 %v862, %v865
      %vm867 = vweird.f32 %v862
      %v868 = vsel %vm867, %v862, %v866
      %v869 = vmul.f32 %v859, %v868
      %v870 = vmul.f32 %v861, %v868
      %v871 = vsub.f32 %v854, %v869
      %v872 = vsub.f32 %v855, %v870
      %v873 = vmul.f32 %v871, %v871
      %v874 = vmul.f32 %v872, %v872
      %875 = vadd.xlane.f32.xlu0 %v873
      %v876 = vpop.xlane.xlu0 %875
      %877 = vadd.xlane.f32.xlu0 %v874
      %v878 = vpop.xlane.xlu0 %877
      %v879 = vmul.f32 %v876, %v868
      %v880 = vmul.f32 %v878, %v868
      %v881 = vadd.f32 %v879, 1e-05
      %v882 = vadd.f32 %v880, 1e-05
      %v883 = vrsqrt.pop %v881
      %v884 = vmul.f32 %v883, %v881
      %v885 = vmul.f32 %v884, %v883
      %v886 = vmul.f32 0.5, %v885
      %v887 = vsub.f32 1.5, %v886
      %v888 = vmul.f32 %v883, %v887
      %vm889 = vweird.f32 %v881
      %vm890 = vweird.f32 %v883
      %vm891 = vmor %vm889, %vm890
      %v892 = vsel %vm891, %v883, %v888
      %v893 = vrsqrt.pop %v882
      %v894 = vmul.f32 %v893, %v882
      %v895 = vmul.f32 %v894, %v893
      %v896 = vmul.f32 0.5, %v895
      %v897 = vsub.f32 1.5, %v896
      %v898 = vmul.f32 %v893, %v897
      %vm899 = vweird.f32 %v882
      %vm900 = vweird.f32 %v893
      %vm901 = vmor %vm899, %vm900
      %v902 = vsel %vm901, %v893, %v898
      %v903 = vmul.f32 %v871, %v892
      %v904 = vmul.f32 %v872, %v902
      %v906 = vperm.slane %v856, 0
      %v908 = vmul.f32 %v903, %v906
      %v909 = vmul.f32 %v904, %v906
      %v911 = vperm.slane %v857, 0
      %v913 = vadd.f32 %v908, %v911
      %v914 = vadd.f32 %v909, %v911
      %v915 = vpack.c.bf16 %v914, %v913
      %v916 = vld [vmem:[%s745] sm:$0xff]
      %v917 = vld [vmem:[%s745 + $0x8] sm:$0xf]
      %v918 = vld [vmem:[%s745 + $0xc] sm:$0xff]
      %v919 = vld [vmem:[%s745 + $0x14] sm:$0xf]
      %v920 = vld [vmem:[%s745 + $0x18] sm:$0xff]
      %v921 = vld [vmem:[%s745 + $0x20] sm:$0xf]
      %v922 = vld [vmem:[%s745 + $0x24] sm:$0xff]
      %v923 = vld [vmem:[%s745 + $0x2c] sm:$0xf]
      %v924 = vld [vmem:[%s745 + $0x30] sm:$0xff]
      %v925 = vld [vmem:[%s745 + $0x38] sm:$0xf]
      %v926 = vld [vmem:[%s745 + $0x3c] sm:$0xff]
      %v927 = vld [vmem:[%s745 + $0x44] sm:$0xf]
      %v928 = vld [vmem:[%s745 + $0x48] sm:$0xff]
      %v929 = vld [vmem:[%s745 + $0x50] sm:$0xf]
      %v930 = vld [vmem:[%s745 + $0x54] sm:$0xff]
      %v931 = vld [vmem:[%s745 + $0x5c] sm:$0xf]
      %v932 = vld [vmem:[%s745 + $0x60] sm:$0xff]
      %v933 = vld [vmem:[%s745 + $0x68] sm:$0xf]
      %v934 = vld [vmem:[%s745 + $0x6c] sm:$0xff]
      %v935 = vld [vmem:[%s745 + $0x74] sm:$0xf]
      %v936 = vld [vmem:[%s745 + $0x78] sm:$0xff]
      %v937 = vld [vmem:[%s745 + $0x80] sm:$0xf]
      %v938 = vld [vmem:[%s745 + $0x84] sm:$0xff]
      %v939 = vld [vmem:[%s745 + $0x8c] sm:$0xf]
      %v940 = vld [vmem:[%s745 + $0x90] sm:$0xff]
      %v941 = vld [vmem:[%s745 + $0x98] sm:$0xf]
      %v942 = vld [vmem:[%s745 + $0x9c] sm:$0xff]
      %v943 = vld [vmem:[%s745 + $0xa4] sm:$0xf]
      %v944 = vld [vmem:[%s745 + $0xa8] sm:$0xff]
      %v945 = vld [vmem:[%s745 + $0xb0] sm:$0xf]
      %v946 = vld [vmem:[%s745 + $0xb4] sm:$0xff]
      %v947 = vld [vmem:[%s745 + $0xbc] sm:$0xf]
      %v948 = vld [vmem:[%s749] sm:$0x7]
      %v950 = vperm.slane %v948, 0
      %v951 = vperm.slane %v948, 1
      %v952 = vperm.slane %v948, 2
      %v988 = vunpack.c.l.b16 %v916
      %v989 = vunpack.c.h.b16 %v916
      %v990 = vunpack.c.l.b16 %v917
      %v991 = vunpack.c.l.b16 %v918
      %v992 = vunpack.c.h.b16 %v918
      %v993 = vunpack.c.l.b16 %v919
      %v994 = vunpack.c.l.b16 %v920
      %v995 = vunpack.c.h.b16 %v920
      %v996 = vunpack.c.l.b16 %v921
      %v997 = vunpack.c.l.b16 %v922
      %v998 = vunpack.c.h.b16 %v922
      %v999 = vunpack.c.l.b16 %v923
      %v1000 = vunpack.c.l.b16 %v924
      %v1001 = vunpack.c.h.b16 %v924
      %v1002 = vunpack.c.l.b16 %v925
      %v1003 = vunpack.c.l.b16 %v926
      %v1004 = vunpack.c.h.b16 %v926
      %v1005 = vunpack.c.l.b16 %v927
      %v1006 = vunpack.c.l.b16 %v928
      %v1007 = vunpack.c.h.b16 %v928
      %v1008 = vunpack.c.l.b16 %v929
      %v1009 = vunpack.c.l.b16 %v930
      %v1010 = vunpack.c.h.b16 %v930
      %v1011 = vunpack.c.l.b16 %v931
      %v1012 = vunpack.c.l.b16 %v932
      %v1013 = vunpack.c.h.b16 %v932
      %v1014 = vunpack.c.l.b16 %v933
      %v1015 = vunpack.c.l.b16 %v934
      %v1016 = vunpack.c.h.b16 %v934
      %v1017 = vunpack.c.l.b16 %v935
      %v1018 = vunpack.c.l.b16 %v936
      %v1019 = vunpack.c.h.b16 %v936
      %v1020 = vunpack.c.l.b16 %v937
      %v1021 = vunpack.c.l.b16 %v938
      %v1022 = vunpack.c.h.b16 %v938
      %v1023 = vunpack.c.l.b16 %v939
      %v1024 = vunpack.c.l.b16 %v940
      %v1025 = vunpack.c.h.b16 %v940
      %v1026 = vunpack.c.l.b16 %v941
      %v1027 = vunpack.c.l.b16 %v942
      %v1028 = vunpack.c.h.b16 %v942
      %v1029 = vunpack.c.l.b16 %v943
      %v1030 = vunpack.c.l.b16 %v944
      %v1031 = vunpack.c.h.b16 %v944
      %v1032 = vunpack.c.l.b16 %v945
      %v1033 = vunpack.c.l.b16 %v946
      %v1034 = vunpack.c.h.b16 %v946
      %v1035 = vunpack.c.l.b16 %v947
      %v1036 = vpack.c.b16 %v991, %v988
      %v1037 = vpack.c.b16 %v992, %v989
      %v1038 = vpack.c.b16 %v993, %v990
      %v1039 = vpack.c.b16 %v997, %v994
      %v1040 = vpack.c.b16 %v998, %v995
      %v1041 = vpack.c.b16 %v999, %v996
      %v1042 = vpack.c.b16 %v1003, %v1000
      %v1043 = vpack.c.b16 %v1004, %v1001
      %v1044 = vpack.c.b16 %v1005, %v1002
      %v1045 = vpack.c.b16 %v1009, %v1006
      %v1046 = vpack.c.b16 %v1010, %v1007
      %v1047 = vpack.c.b16 %v1011, %v1008
      %v1048 = vpack.c.b16 %v1015, %v1012
      %v1049 = vpack.c.b16 %v1016, %v1013
      %v1050 = vpack.c.b16 %v1017, %v1014
      %v1051 = vpack.c.b16 %v1021, %v1018
      %v1052 = vpack.c.b16 %v1022, %v1019
      %v1053 = vpack.c.b16 %v1023, %v1020
      %v1054 = vpack.c.b16 %v1027, %v1024
      %v1055 = vpack.c.b16 %v1028, %v1025
      %v1056 = vpack.c.b16 %v1029, %v1026
      %v1057 = vpack.c.b16 %v1033, %v1030
      %v1058 = vpack.c.b16 %v1034, %v1031
      %v1059 = vpack.c.b16 %v1035, %v1032
      %1084 = vmatpush.bf16.msra.mxu0 %v1057
      %1085 = vmatpush.bf16.msra.mxu0 %v1054
      %1086 = vmatpush.bf16.msra.mxu0 %v1051
      %1087 = vmatpush.bf16.msra.mxu0 %v1048
      %1088 = vmatpush.bf16.msra.mxu0 %v1045
      %1089 = vmatpush.bf16.msra.mxu0 %v1042
      %1090 = vmatpush.bf16.msra.mxu0 %v1039
      %1091 = vmatpush.bf16.msra.mxu0 %v1036
      %1092 = vmatmul.bf16.gmra.mxu0 %v915
      %v1093 = vpop.f32.mrf.mxu0
      %v1094 = vadd.f32 %v950, %v1093
      %v1095 = vpop.f32.mrf.mxu0
      %v1096 = vadd.f32 %v950, %v1095
      %1097 = vdwg.mxu0
      %1098 = vmatpush.bf16.msra.mxu0 %v1058
      %1099 = vmatpush.bf16.msra.mxu0 %v1055
      %1100 = vmatpush.bf16.msra.mxu0 %v1052
      %1101 = vmatpush.bf16.msra.mxu0 %v1049
      %1102 = vmatpush.bf16.msra.mxu0 %v1046
      %1103 = vmatpush.bf16.msra.mxu0 %v1043
      %1104 = vmatpush.bf16.msra.mxu0 %v1040
      %1105 = vmatpush.bf16.msra.mxu0 %v1037
      %1106 = vmatmul.bf16.gmra.mxu0 %v915
      %v1107 = vpop.f32.mrf.mxu0
      %v1108 = vadd.f32 %v951, %v1107
      %v1109 = vpop.f32.mrf.mxu0
      %v1110 = vadd.f32 %v951, %v1109
      %1111 = vdwg.mxu0
      %1112 = vmatpush.bf16.msra.mxu0 %v1059
      %1113 = vmatpush.bf16.msra.mxu0 %v1056
      %1114 = vmatpush.bf16.msra.mxu0 %v1053
      %1115 = vmatpush.bf16.msra.mxu0 %v1050
      %1116 = vmatpush.bf16.msra.mxu0 %v1047
      %1117 = vmatpush.bf16.msra.mxu0 %v1044
      %1118 = vmatpush.bf16.msra.mxu0 %v1041
      %1119 = vmatpush.bf16.msra.mxu0 %v1038
      %1120 = vmatmul.bf16.gmra.mxu0 %v915
      %v1121 = vpop.f32.mrf.mxu0
      %v1122 = vadd.f32 %v952, %v1121
      %v1123 = vpop.f32.mrf.mxu0
      %v1124 = vadd.f32 %v952, %v1123
      %1125 = vdwg.mxu0
      %v1126 = vpack.c.bf16 %v1108, %v1094
      %v1127 = vpack.c.bf16 %v1122, %v1122
      %v1128 = vpack.c.bf16 %v1110, %v1096
      %v1129 = vpack.c.bf16 %v1124, %v1124
      %v1132 = vunpack.c.l.b16 %v1126
      %v1133 = vunpack.c.l.b16 %v1128
      %v1134 = vpack.c.b16 %v1133, %v1132
      %v1135 = vunpack.c.h.b16 %v1126
      %v1136 = vunpack.c.h.b16 %v1128
      %v1137 = vpack.c.b16 %v1136, %v1135
      %vm1138 = vcmask 261120
      %v1140 = vsel %vm1138, %v1134, 0
      %v1143 = vsel %vm1138, %v1137, 0
      %1145 = vmatpush.bf16.xpose.msra.mxu0 0
      %1146 = vmatpush.bf16.xpose.msra.mxu0 0
      %1147 = vmatpush.bf16.xpose.msra.mxu0 0
      %1148 = vmatpush.bf16.xpose.msra.mxu0 0
      %1149 = vmatpush.bf16.xpose.msra.mxu0 0
      %1150 = vmatpush.bf16.xpose.msra.mxu0 0
      %1151 = vmatpush.bf16.xpose.msra.mxu0 0
      %1152 = vmatpush.bf16.xpose.msra.mxu0 %v1143
      %1153 = vmatmul.bf16.gmra.mxu0 %v1140
      %v1154 = vpop.f32.mrf.mxu0
      %v1155 = vadd.f32 0.0, %v1154
      %v1156 = vpop.f32.mrf.mxu0
      %v1157 = vadd.f32 0.0, %v1156
      %1158 = vdwg.mxu0
      %v1159 = vmul.f32 %v1155, 0.17677669
      %v1160 = vmul.f32 %v1157, 0.17677669
      %vm1161 = vcmask 130048
      %v1162 = vsel %vm1161, %v1159, -inf
      %1163 = vmax.xlane.f32.xlu0 %v1162
      %v1164 = vpop.xlane.xlu0 %1163
      %v1165 = vsel %vm1161, %v1160, -inf
      %1166 = vmax.xlane.f32.xlu0 %v1165
      %v1167 = vpop.xlane.xlu0 %1166
      %v1168 = vsub.f32 %v1159, %v1164
      %v1169 = vsub.f32 %v1160, %v1167
      %v1170 = vmul.f32 %v1168, 1.442695
      %v1171 = vpow.pop %v1170
      %v1172 = vmul.f32 %v1169, 1.442695
      %v1173 = vpow.pop %v1172
      %v1174 = vsel %vm1161, %v1171, 0.0
      %1175 = vadd.xlane.f32.xlu0 %v1174
      %v1176 = vpop.xlane.xlu0 %1175
      %v1177 = vsel %vm1161, %v1173, 0.0
      %1178 = vadd.xlane.f32.xlu0 %v1177
      %v1179 = vpop.xlane.xlu0 %1178
      %v1180 = vrcp.pop %v1176
      %v1181 = vrcp.pop %v1179
      %v1182 = vmul.f32 %v1171, %v1180
      %v1183 = vmul.f32 %v1173, %v1181
      %v1184 = vpack.c.bf16 %v1183, %v1182
      %v1187 = vunpack.c.l.b16 %v1127
      %v1188 = vunpack.c.l.b16 %v1129
      %v1189 = vpack.c.b16 %v1188, %v1187
      %v1192 = vsel %vm1161, %v1184, 0
      %1194 = vmatpush.bf16.msra.mxu0 0
      %1195 = vmatpush.bf16.msra.mxu0 0
      %1196 = vmatpush.bf16.msra.mxu0 0
      %1197 = vmatpush.bf16.msra.mxu0 0
      %1198 = vmatpush.bf16.msra.mxu0 0
      %1199 = vmatpush.bf16.msra.mxu0 0
      %1200 = vmatpush.bf16.msra.mxu0 0
      %1201 = vmatpush.bf16.msra.mxu0 %v1189
      %1202 = vmatmul.bf16.gmra.mxu0 %v1192
      %v1203 = vpop.f32.mrf.mxu0
      %v1204 = vadd.f32 0.0, %v1203
      %v1205 = vpop.f32.mrf.mxu0
      %v1206 = vadd.f32 0.0, %v1205
      %1207 = vdwg.mxu0
      %1208 = vst.msk [vmem:[#allocation3] sm:$0xff] %vm1138, %v1204
      %1209 = vst.msk [vmem:[#allocation3 + $0x8] sm:$0xff] %vm1138, %v1206
      %1210 = vrot.lane.b32.xlu0 %v1134, 96
      %v1211 = vpop.permute.xlu0 %1210
      %1212 = vrot.lane.b32.xlu0 %v1137, 96
      %v1213 = vpop.permute.xlu0 %1212
      %v1215 = vsel %vm1138, %v1211, 0
      %v1218 = vsel %vm1138, %v1213, 0
      %1220 = vmatpush.bf16.xpose.msra.mxu0 0
      %1221 = vmatpush.bf16.xpose.msra.mxu0 0
      %1222 = vmatpush.bf16.xpose.msra.mxu0 0
      %1223 = vmatpush.bf16.xpose.msra.mxu0 0
      %1224 = vmatpush.bf16.xpose.msra.mxu0 0
      %1225 = vmatpush.bf16.xpose.msra.mxu0 0
      %1226 = vmatpush.bf16.xpose.msra.mxu0 0
      %1227 = vmatpush.bf16.xpose.msra.mxu0 %v1218
      %1228 = vmatmul.bf16.gmra.mxu0 %v1215
      %v1229 = vpop.f32.mrf.mxu0
      %v1230 = vadd.f32 0.0, %v1229
      %v1231 = vpop.f32.mrf.mxu0
      %v1232 = vadd.f32 0.0, %v1231
      %1233 = vdwg.mxu0
      %v1234 = vmul.f32 %v1230, 0.17677669
      %v1235 = vmul.f32 %v1232, 0.17677669
      %v1236 = vsel %vm1161, %v1234, -inf
      %1237 = vmax.xlane.f32.xlu0 %v1236
      %v1238 = vpop.xlane.xlu0 %1237
      %v1239 = vsel %vm1161, %v1235, -inf
      %1240 = vmax.xlane.f32.xlu0 %v1239
      %v1241 = vpop.xlane.xlu0 %1240
      %v1242 = vsub.f32 %v1234, %v1238
      %v1243 = vsub.f32 %v1235, %v1241
      %v1244 = vmul.f32 %v1242, 1.442695
      %v1245 = vpow.pop %v1244
      %v1246 = vmul.f32 %v1243, 1.442695
      %v1247 = vpow.pop %v1246
      %v1248 = vsel %vm1161, %v1245, 0.0
      %1249 = vadd.xlane.f32.xlu0 %v1248
      %v1250 = vpop.xlane.xlu0 %1249
      %v1251 = vsel %vm1161, %v1247, 0.0
      %1252 = vadd.xlane.f32.xlu0 %v1251
      %v1253 = vpop.xlane.xlu0 %1252
      %v1254 = vrcp.pop %v1250
      %v1255 = vrcp.pop %v1253
      %v1256 = vmul.f32 %v1245, %v1254
      %v1257 = vmul.f32 %v1247, %v1255
      %v1258 = vpack.c.bf16 %v1257, %v1256
      %1259 = vrot.lane.b32.xlu0 %v1189, 96
      %v1260 = vpop.permute.xlu0 %1259
      %v1263 = vsel %vm1161, %v1258, 0
      %1265 = vmatpush.bf16.msra.mxu0 0
      %1266 = vmatpush.bf16.msra.mxu0 0
      %1267 = vmatpush.bf16.msra.mxu0 0
      %1268 = vmatpush.bf16.msra.mxu0 0
      %1269 = vmatpush.bf16.msra.mxu0 0
      %1270 = vmatpush.bf16.msra.mxu0 0
      %1271 = vmatpush.bf16.msra.mxu0 0
      %1272 = vmatpush.bf16.msra.mxu0 %v1260
      %1273 = vmatmul.bf16.gmra.mxu0 %v1263
      %v1274 = vpop.f32.mrf.mxu0
      %v1275 = vadd.f32 0.0, %v1274
      %v1276 = vpop.f32.mrf.mxu0
      %v1277 = vadd.f32 0.0, %v1276
      %1278 = vdwg.mxu0
      %1281 = vrot.lane.b32.xlu0 %v1275, 32
      %v1282 = vpop.permute.xlu0 %1281
      %1283 = vrot.lane.b32.xlu0 %v1277, 32
      %v1284 = vpop.permute.xlu0 %1283
      %vm1287 = vcmask 523520
      %1288 = vst.msk [vmem:[#allocation3] sm:$0xff] %vm1287, %v1282
      %1289 = vst.msk [vmem:[#allocation3 + $0x8] sm:$0xff] %vm1287, %v1284
      %1290 = vrot.lane.b32.xlu0 %v1134, 64
      %v1291 = vpop.permute.xlu0 %1290
      %1292 = vrot.lane.b32.xlu0 %v1137, 64
      %v1293 = vpop.permute.xlu0 %1292
      %v1295 = vsel %vm1138, %v1291, 0
      %v1298 = vsel %vm1138, %v1293, 0
      %1300 = vmatpush.bf16.xpose.msra.mxu0 0
      %1301 = vmatpush.bf16.xpose.msra.mxu0 0
      %1302 = vmatpush.bf16.xpose.msra.mxu0 0
      %1303 = vmatpush.bf16.xpose.msra.mxu0 0
      %1304 = vmatpush.bf16.xpose.msra.mxu0 0
      %1305 = vmatpush.bf16.xpose.msra.mxu0 0
      %1306 = vmatpush.bf16.xpose.msra.mxu0 0
      %1307 = vmatpush.bf16.xpose.msra.mxu0 %v1298
      %1308 = vmatmul.bf16.gmra.mxu0 %v1295
      %v1309 = vpop.f32.mrf.mxu0
      %v1310 = vadd.f32 0.0, %v1309
      %v1311 = vpop.f32.mrf.mxu0
      %v1312 = vadd.f32 0.0, %v1311
      %1313 = vdwg.mxu0
      %v1314 = vmul.f32 %v1310, 0.17677669
      %v1315 = vmul.f32 %v1312, 0.17677669
      %v1316 = vsel %vm1161, %v1314, -inf
      %1317 = vmax.xlane.f32.xlu0 %v1316
      %v1318 = vpop.xlane.xlu0 %1317
      %v1319 = vsel %vm1161, %v1315, -inf
      %1320 = vmax.xlane.f32.xlu0 %v1319
      %v1321 = vpop.xlane.xlu0 %1320
      %v1322 = vsub.f32 %v1314, %v1318
      %v1323 = vsub.f32 %v1315, %v1321
      %v1324 = vmul.f32 %v1322, 1.442695
      %v1325 = vpow.pop %v1324
      %v1326 = vmul.f32 %v1323, 1.442695
      %v1327 = vpow.pop %v1326
      %v1328 = vsel %vm1161, %v1325, 0.0
      %1329 = vadd.xlane.f32.xlu0 %v1328
      %v1330 = vpop.xlane.xlu0 %1329
      %v1331 = vsel %vm1161, %v1327, 0.0
      %1332 = vadd.xlane.f32.xlu0 %v1331
      %v1333 = vpop.xlane.xlu0 %1332
      %v1334 = vrcp.pop %v1330
      %v1335 = vrcp.pop %v1333
      %v1336 = vmul.f32 %v1325, %v1334
      %v1337 = vmul.f32 %v1327, %v1335
      %v1338 = vpack.c.bf16 %v1337, %v1336
      %1339 = vrot.lane.b32.xlu0 %v1189, 64
      %v1340 = vpop.permute.xlu0 %1339
      %v1343 = vsel %vm1161, %v1338, 0
      %1345 = vmatpush.bf16.msra.mxu0 0
      %1346 = vmatpush.bf16.msra.mxu0 0
      %1347 = vmatpush.bf16.msra.mxu0 0
      %1348 = vmatpush.bf16.msra.mxu0 0
      %1349 = vmatpush.bf16.msra.mxu0 0
      %1350 = vmatpush.bf16.msra.mxu0 0
      %1351 = vmatpush.bf16.msra.mxu0 0
      %1352 = vmatpush.bf16.msra.mxu0 %v1340
      %1353 = vmatmul.bf16.gmra.mxu0 %v1343
      %v1354 = vpop.f32.mrf.mxu0
      %v1355 = vadd.f32 0.0, %v1354
      %v1356 = vpop.f32.mrf.mxu0
      %v1357 = vadd.f32 0.0, %v1356
      %1358 = vdwg.mxu0
      %1361 = vrot.lane.b32.xlu0 %v1355, 64
      %v1362 = vpop.permute.xlu0 %1361
      %1363 = vrot.lane.b32.xlu0 %v1357, 64
      %v1364 = vpop.permute.xlu0 %1363
      %vm1367 = vcmask 785920
      %1368 = vst.msk [vmem:[#allocation3] sm:$0xff] %vm1367, %v1362
      %1369 = vst.msk [vmem:[#allocation3 + $0x8] sm:$0xff] %vm1367, %v1364
      %1370 = vrot.lane.b32.xlu0 %v1134, 32
      %v1371 = vpop.permute.xlu0 %1370
      %1372 = vrot.lane.b32.xlu0 %v1137, 32
      %v1373 = vpop.permute.xlu0 %1372
      %v1375 = vsel %vm1138, %v1371, 0
      %v1378 = vsel %vm1138, %v1373, 0
      %1380 = vmatpush.bf16.xpose.msra.mxu0 0
      %1381 = vmatpush.bf16.xpose.msra.mxu0 0
      %1382 = vmatpush.bf16.xpose.msra.mxu0 0
      %1383 = vmatpush.bf16.xpose.msra.mxu0 0
      %1384 = vmatpush.bf16.xpose.msra.mxu0 0
      %1385 = vmatpush.bf16.xpose.msra.mxu0 0
      %1386 = vmatpush.bf16.xpose.msra.mxu0 0
      %1387 = vmatpush.bf16.xpose.msra.mxu0 %v1378
      %1388 = vmatmul.bf16.gmra.mxu0 %v1375
      %v1389 = vpop.f32.mrf.mxu0
      %v1390 = vadd.f32 0.0, %v1389
      %v1391 = vpop.f32.mrf.mxu0
      %v1392 = vadd.f32 0.0, %v1391
      %1393 = vdwg.mxu0
      %v1394 = vmul.f32 %v1390, 0.17677669
      %v1395 = vmul.f32 %v1392, 0.17677669
      %v1396 = vsel %vm1161, %v1394, -inf
      %1397 = vmax.xlane.f32.xlu0 %v1396
      %v1398 = vpop.xlane.xlu0 %1397
      %v1399 = vsel %vm1161, %v1395, -inf
      %1400 = vmax.xlane.f32.xlu0 %v1399
      %v1401 = vpop.xlane.xlu0 %1400
      %v1402 = vsub.f32 %v1394, %v1398
      %v1403 = vsub.f32 %v1395, %v1401
      %v1404 = vmul.f32 %v1402, 1.442695
      %v1405 = vpow.pop %v1404
      %v1406 = vmul.f32 %v1403, 1.442695
      %v1407 = vpow.pop %v1406
      %v1408 = vsel %vm1161, %v1405, 0.0
      %1409 = vadd.xlane.f32.xlu0 %v1408
      %v1410 = vpop.xlane.xlu0 %1409
      %v1411 = vsel %vm1161, %v1407, 0.0
      %1412 = vadd.xlane.f32.xlu0 %v1411
      %v1413 = vpop.xlane.xlu0 %1412
      %v1414 = vrcp.pop %v1410
      %v1415 = vrcp.pop %v1413
      %v1416 = vmul.f32 %v1405, %v1414
      %v1417 = vmul.f32 %v1407, %v1415
      %v1418 = vpack.c.bf16 %v1417, %v1416
      %1419 = vrot.lane.b32.xlu0 %v1189, 32
      %v1420 = vpop.permute.xlu0 %1419
      %v1423 = vsel %vm1161, %v1418, 0
      %1425 = vmatpush.bf16.msra.mxu0 0
      %1426 = vmatpush.bf16.msra.mxu0 0
      %1427 = vmatpush.bf16.msra.mxu0 0
      %1428 = vmatpush.bf16.msra.mxu0 0
      %1429 = vmatpush.bf16.msra.mxu0 0
      %1430 = vmatpush.bf16.msra.mxu0 0
      %1431 = vmatpush.bf16.msra.mxu0 0
      %1432 = vmatpush.bf16.msra.mxu0 %v1420
      %1433 = vmatmul.bf16.gmra.mxu0 %v1423
      %v1434 = vpop.f32.mrf.mxu0
      %v1435 = vadd.f32 0.0, %v1434
      %v1436 = vpop.f32.mrf.mxu0
      %v1437 = vadd.f32 0.0, %v1436
      %1438 = vdwg.mxu0
      %1441 = vrot.lane.b32.xlu0 %v1435, 96
      %v1442 = vpop.permute.xlu0 %1441
      %1443 = vrot.lane.b32.xlu0 %v1437, 96
      %v1444 = vpop.permute.xlu0 %1443
      %vm1447 = vcmask 1048320
      %1448 = vst.msk [vmem:[#allocation3] sm:$0xff] %vm1447, %v1442
      %1449 = vst.msk [vmem:[#allocation3 + $0x8] sm:$0xff] %vm1447, %v1444
      %v1450 = vld [vmem:[#allocation3] sm:$0xff]
      %v1451 = vld [vmem:[#allocation3 + $0x8] sm:$0xff]
      %v1452 = vpack.c.bf16 %v1451, %v1450
      %v1453 = vld [vmem:[%s754] sm:$0xf]
      %v1454 = vld [vmem:[%s754 + $0x4] sm:$0xf]
      %v1455 = vld [vmem:[%s754 + $0x8] sm:$0xf]
      %v1456 = vld [vmem:[%s754 + $0xc] sm:$0xf]
      %v1457 = vld [vmem:[%s754 + $0x10] sm:$0xf]
      %v1458 = vld [vmem:[%s754 + $0x14] sm:$0xf]
      %v1459 = vld [vmem:[%s754 + $0x18] sm:$0xf]
      %v1460 = vld [vmem:[%s754 + $0x1c] sm:$0xf]
      %v1461 = vld [vmem:[%s754 + $0x20] sm:$0xf]
      %v1462 = vld [vmem:[%s754 + $0x24] sm:$0xf]
      %v1463 = vld [vmem:[%s754 + $0x28] sm:$0xf]
      %v1464 = vld [vmem:[%s754 + $0x2c] sm:$0xf]
      %v1465 = vld [vmem:[%s754 + $0x30] sm:$0xf]
      %v1466 = vld [vmem:[%s754 + $0x34] sm:$0xf]
      %v1467 = vld [vmem:[%s754 + $0x38] sm:$0xf]
      %v1468 = vld [vmem:[%s754 + $0x3c] sm:$0xf]
      %v1469 = vld [vmem:[%s757] sm:$0x1]
      %v1471 = vperm.slane %v1469, 0
      %v1489 = vunpack.c.l.b16 %v1453
      %v1490 = vunpack.c.l.b16 %v1454
      %v1491 = vunpack.c.l.b16 %v1455
      %v1492 = vunpack.c.l.b16 %v1456
      %v1493 = vunpack.c.l.b16 %v1457
      %v1494 = vunpack.c.l.b16 %v1458
      %v1495 = vunpack.c.l.b16 %v1459
      %v1496 = vunpack.c.l.b16 %v1460
      %v1497 = vunpack.c.l.b16 %v1461
      %v1498 = vunpack.c.l.b16 %v1462
      %v1499 = vunpack.c.l.b16 %v1463
      %v1500 = vunpack.c.l.b16 %v1464
      %v1501 = vunpack.c.l.b16 %v1465
      %v1502 = vunpack.c.l.b16 %v1466
      %v1503 = vunpack.c.l.b16 %v1467
      %v1504 = vunpack.c.l.b16 %v1468
      %v1505 = vpack.c.b16 %v1490, %v1489
      %v1506 = vpack.c.b16 %v1492, %v1491
      %v1507 = vpack.c.b16 %v1494, %v1493
      %v1508 = vpack.c.b16 %v1496, %v1495
      %v1509 = vpack.c.b16 %v1498, %v1497
      %v1510 = vpack.c.b16 %v1500, %v1499
      %v1511 = vpack.c.b16 %v1502, %v1501
      %v1512 = vpack.c.b16 %v1504, %v1503
      %1521 = vmatpush.bf16.msra.mxu0 %v1512
      %1522 = vmatpush.bf16.msra.mxu0 %v1511
      %1523 = vmatpush.bf16.msra.mxu0 %v1510
      %1524 = vmatpush.bf16.msra.mxu0 %v1509
      %1525 = vmatpush.bf16.msra.mxu0 %v1508
      %1526 = vmatpush.bf16.msra.mxu0 %v1507
      %1527 = vmatpush.bf16.msra.mxu0 %v1506
      %1528 = vmatpush.bf16.msra.mxu0 %v1505
      %1529 = vmatmul.bf16.gmra.mxu0 %v1452
      %v1530 = vpop.f32.mrf.mxu0
      %v1531 = vadd.f32 %v1471, %v1530
      %v1532 = vpop.f32.mrf.mxu0
      %v1533 = vadd.f32 %v1471, %v1532
      %1534 = vdwg.mxu0
      %v1535 = vadd.f32 %v854, %v1531
      %v1536 = vadd.f32 %v855, %v1533
      %v1537 = vld [vmem:[%s760] sm:$0x1]
      %v1538 = vld [vmem:[%s763] sm:$0x1]
      %1539 = vadd.xlane.f32.xlu0 %v1535
      %v1540 = vpop.xlane.xlu0 %1539
      %1541 = vadd.xlane.f32.xlu0 %v1536
      %v1542 = vpop.xlane.xlu0 %1541
      %v1543 = vmul.f32 %v1540, %v868
      %v1544 = vmul.f32 %v1542, %v868
      %v1545 = vsub.f32 %v1535, %v1543
      %v1546 = vsub.f32 %v1536, %v1544
      %v1547 = vmul.f32 %v1545, %v1545
      %v1548 = vmul.f32 %v1546, %v1546
      %1549 = vadd.xlane.f32.xlu0 %v1547
      %v1550 = vpop.xlane.xlu0 %1549
      %1551 = vadd.xlane.f32.xlu0 %v1548
      %v1552 = vpop.xlane.xlu0 %1551
      %v1553 = vmul.f32 %v1550, %v868
      %v1554 = vmul.f32 %v1552, %v868
      %v1555 = vadd.f32 %v1553, 1e-05
      %v1556 = vadd.f32 %v1554, 1e-05
      %v1557 = vrsqrt.pop %v1555
      %v1558 = vmul.f32 %v1557, %v1555
      %v1559 = vmul.f32 %v1558, %v1557
      %v1560 = vmul.f32 0.5, %v1559
      %v1561 = vsub.f32 1.5, %v1560
      %v1562 = vmul.f32 %v1557, %v1561
      %vm1563 = vweird.f32 %v1555
      %vm1564 = vweird.f32 %v1557
      %vm1565 = vmor %vm1563, %vm1564
      %v1566 = vsel %vm1565, %v1557, %v1562
      %v1567 = vrsqrt.pop %v1556
      %v1568 = vmul.f32 %v1567, %v1556
      %v1569 = vmul.f32 %v1568, %v1567
      %v1570 = vmul.f32 0.5, %v1569
      %v1571 = vsub.f32 1.5, %v1570
      %v1572 = vmul.f32 %v1567, %v1571
      %vm1573 = vweird.f32 %v1556
      %vm1574 = vweird.f32 %v1567
      %vm1575 = vmor %vm1573, %vm1574
      %v1576 = vsel %vm1575, %v1567, %v1572
      %v1577 = vmul.f32 %v1545, %v1566
      %v1578 = vmul.f32 %v1546, %v1576
      %v1580 = vperm.slane %v1537, 0
      %v1582 = vmul.f32 %v1577, %v1580
      %v1583 = vmul.f32 %v1578, %v1580
      %v1585 = vperm.slane %v1538, 0
      %v1587 = vadd.f32 %v1582, %v1585
      %v1588 = vadd.f32 %v1583, %v1585
      %v1589 = vpack.c.bf16 %v1588, %v1587
      %v1590 = vld [vmem:[%s768] sm:$0xff]
      %v1591 = vld [vmem:[%s768 + $0x8] sm:$0xff]
      %v1592 = vld [vmem:[%s768 + $0x10] sm:$0xff]
      %v1593 = vld [vmem:[%s768 + $0x18] sm:$0xff]
      %v1594 = vld [vmem:[%s768 + $0x20] sm:$0xff]
      %v1595 = vld [vmem:[%s768 + $0x28] sm:$0xff]
      %v1596 = vld [vmem:[%s768 + $0x30] sm:$0xff]
      %v1597 = vld [vmem:[%s768 + $0x38] sm:$0xff]
      %v1598 = vld [vmem:[%s768 + $0x40] sm:$0xff]
      %v1599 = vld [vmem:[%s768 + $0x48] sm:$0xff]
      %v1600 = vld [vmem:[%s768 + $0x50] sm:$0xff]
      %v1601 = vld [vmem:[%s768 + $0x58] sm:$0xff]
      %v1602 = vld [vmem:[%s768 + $0x60] sm:$0xff]
      %v1603 = vld [vmem:[%s768 + $0x68] sm:$0xff]
      %v1604 = vld [vmem:[%s768 + $0x70] sm:$0xff]
      %v1605 = vld [vmem:[%s768 + $0x78] sm:$0xff]
      %v1606 = vld [vmem:[%s772] sm:$0x3]
      %v1608 = vperm.slane %v1606, 0
      %v1609 = vperm.slane %v1606, 1
      %v1628 = vunpack.c.l.b16 %v1590
      %v1629 = vunpack.c.h.b16 %v1590
      %v1630 = vunpack.c.l.b16 %v1591
      %v1631 = vunpack.c.h.b16 %v1591
      %v1632 = vunpack.c.l.b16 %v1592
      %v1633 = vunpack.c.h.b16 %v1592
      %v1634 = vunpack.c.l.b16 %v1593
      %v1635 = vunpack.c.h.b16 %v1593
      %v1636 = vunpack.c.l.b16 %v1594
      %v1637 = vunpack.c.h.b16 %v1594
      %v1638 = vunpack.c.l.b16 %v1595
      %v1639 = vunpack.c.h.b16 %v1595
      %v1640 = vunpack.c.l.b16 %v1596
      %v1641 = vunpack.c.h.b16 %v1596
      %v1642 = vunpack.c.l.b16 %v1597
      %v1643 = vunpack.c.h.b16 %v1597
      %v1644 = vunpack.c.l.b16 %v1598
      %v1645 = vunpack.c.h.b16 %v1598
      %v1646 = vunpack.c.l.b16 %v1599
      %v1647 = vunpack.c.h.b16 %v1599
      %v1648 = vunpack.c.l.b16 %v1600
      %v1649 = vunpack.c.h.b16 %v1600
      %v1650 = vunpack.c.l.b16 %v1601
      %v1651 = vunpack.c.h.b16 %v1601
      %v1652 = vunpack.c.l.b16 %v1602
      %v1653 = vunpack.c.h.b16 %v1602
      %v1654 = vunpack.c.l.b16 %v1603
      %v1655 = vunpack.c.h.b16 %v1603
      %v1656 = vunpack.c.l.b16 %v1604
      %v1657 = vunpack.c.h.b16 %v1604
      %v1658 = vunpack.c.l.b16 %v1605
      %v1659 = vunpack.c.h.b16 %v1605
      %v1660 = vpack.c.b16 %v1630, %v1628
      %v1661 = vpack.c.b16 %v1631, %v1629
      %v1662 = vpack.c.b16 %v1634, %v1632
      %v1663 = vpack.c.b16 %v1635, %v1633
      %v1664 = vpack.c.b16 %v1638, %v1636
      %v1665 = vpack.c.b16 %v1639, %v1637
      %v1666 = vpack.c.b16 %v1642, %v1640
      %v1667 = vpack.c.b16 %v1643, %v1641
      %v1668 = vpack.c.b16 %v1646, %v1644
      %v1669 = vpack.c.b16 %v1647, %v1645
      %v1670 = vpack.c.b16 %v1650, %v1648
      %v1671 = vpack.c.b16 %v1651, %v1649
      %v1672 = vpack.c.b16 %v1654, %v1652
      %v1673 = vpack.c.b16 %v1655, %v1653
      %v1674 = vpack.c.b16 %v1658, %v1656
      %v1675 = vpack.c.b16 %v1659, %v1657
      %1692 = vmatpush.bf16.msra.mxu0 %v1674
      %1693 = vmatpush.bf16.msra.mxu0 %v1672
      %1694 = vmatpush.bf16.msra.mxu0 %v1670
      %1695 = vmatpush.bf16.msra.mxu0 %v1668
      %1696 = vmatpush.bf16.msra.mxu0 %v1666
      %1697 = vmatpush.bf16.msra.mxu0 %v1664
      %1698 = vmatpush.bf16.msra.mxu0 %v1662
      %1699 = vmatpush.bf16.msra.mxu0 %v1660
      %1700 = vmatmul.bf16.gmra.mxu0 %v1589
      %v1701 = vpop.f32.mrf.mxu0
      %v1702 = vadd.f32 %v1608, %v1701
      %v1703 = vpop.f32.mrf.mxu0
      %v1704 = vadd.f32 %v1608, %v1703
      %1705 = vdwg.mxu0
      %1706 = vmatpush.bf16.msra.mxu0 %v1675
      %1707 = vmatpush.bf16.msra.mxu0 %v1673
      %1708 = vmatpush.bf16.msra.mxu0 %v1671
      %1709 = vmatpush.bf16.msra.mxu0 %v1669
      %1710 = vmatpush.bf16.msra.mxu0 %v1667
      %1711 = vmatpush.bf16.msra.mxu0 %v1665
      %1712 = vmatpush.bf16.msra.mxu0 %v1663
      %1713 = vmatpush.bf16.msra.mxu0 %v1661
      %1714 = vmatmul.bf16.gmra.mxu0 %v1589
      %v1715 = vpop.f32.mrf.mxu0
      %v1716 = vadd.f32 %v1609, %v1715
      %v1717 = vpop.f32.mrf.mxu0
      %v1718 = vadd.f32 %v1609, %v1717
      %1719 = vdwg.mxu0
      %v1720 = vmul.f32 %v1702, %v1702
      %v1721 = vmul.f32 %v1716, %v1716
      %v1722 = vmul.f32 %v1704, %v1704
      %v1723 = vmul.f32 %v1718, %v1718
      %v1724 = vmul.f32 %v1702, %v1720
      %v1725 = vmul.f32 %v1716, %v1721
      %v1726 = vmul.f32 %v1704, %v1722
      %v1727 = vmul.f32 %v1718, %v1723
      %v1728 = vmul.f32 %v1724, 0.044715
      %v1729 = vmul.f32 %v1725, 0.044715
      %v1730 = vmul.f32 %v1726, 0.044715
      %v1731 = vmul.f32 %v1727, 0.044715
      %v1732 = vadd.f32 %v1702, %v1728
      %v1733 = vadd.f32 %v1716, %v1729
      %v1734 = vadd.f32 %v1704, %v1730
      %v1735 = vadd.f32 %v1718, %v1731
      %v1736 = vmul.f32 %v1732, 0.7978846
      %v1737 = vmul.f32 %v1733, 0.7978846
      %v1738 = vmul.f32 %v1734, 0.7978846
      %v1739 = vmul.f32 %v1735, 0.7978846
      %v1740 = vtanh.pop %v1736
      %v1741 = vtanh.pop %v1737
      %v1742 = vtanh.pop %v1738
      %v1743 = vtanh.pop %v1739
      %v1744 = vadd.f32 %v1740, 1.0
      %v1745 = vadd.f32 %v1741, 1.0
      %v1746 = vadd.f32 %v1742, 1.0
      %v1747 = vadd.f32 %v1743, 1.0
      %v1748 = vmul.f32 %v1744, 0.5
      %v1749 = vmul.f32 %v1745, 0.5
      %v1750 = vmul.f32 %v1746, 0.5
      %v1751 = vmul.f32 %v1747, 0.5
      %v1752 = vmul.f32 %v1702, %v1748
      %v1753 = vmul.f32 %v1716, %v1749
      %v1754 = vmul.f32 %v1704, %v1750
      %v1755 = vmul.f32 %v1718, %v1751
      %v1756 = vpack.c.bf16 %v1754, %v1752
      %v1757 = vpack.c.bf16 %v1755, %v1753
      %v1758 = vld [vmem:[%s777] sm:$0xf]
      %v1759 = vld [vmem:[%s777 + $0x4] sm:$0xf]
      %v1760 = vld [vmem:[%s777 + $0x8] sm:$0xf]
      %v1761 = vld [vmem:[%s777 + $0xc] sm:$0xf]
      %v1762 = vld [vmem:[%s777 + $0x10] sm:$0xf]
      %v1763 = vld [vmem:[%s777 + $0x14] sm:$0xf]
      %v1764 = vld [vmem:[%s777 + $0x18] sm:$0xf]
      %v1765 = vld [vmem:[%s777 + $0x1c] sm:$0xf]
      %v1766 = vld [vmem:[%s777 + $0x20] sm:$0xf]
      %v1767 = vld [vmem:[%s777 + $0x24] sm:$0xf]
      %v1768 = vld [vmem:[%s777 + $0x28] sm:$0xf]
      %v1769 = vld [vmem:[%s777 + $0x2c] sm:$0xf]
      %v1770 = vld [vmem:[%s777 + $0x30] sm:$0xf]
      %v1771 = vld [vmem:[%s777 + $0x34] sm:$0xf]
      %v1772 = vld [vmem:[%s777 + $0x38] sm:$0xf]
      %v1773 = vld [vmem:[%s777 + $0x3c] sm:$0xf]
      %v1774 = vld [vmem:[%s777 + $0x40] sm:$0xf]
      %v1775 = vld [vmem:[%s777 + $0x44] sm:$0xf]
      %v1776 = vld [vmem:[%s777 + $0x48] sm:$0xf]
      %v1777 = vld [vmem:[%s777 + $0x4c] sm:$0xf]
      %v1778 = vld [vmem:[%s777 + $0x50] sm:$0xf]
      %v1779 = vld [vmem:[%s777 + $0x54] sm:$0xf]
      %v1780 = vld [vmem:[%s777 + $0x58] sm:$0xf]
      %v1781 = vld [vmem:[%s777 + $0x5c] sm:$0xf]
      %v1782 = vld [vmem:[%s777 + $0x60] sm:$0xf]
      %v1783 = vld [vmem:[%s777 + $0x64] sm:$0xf]
      %v1784 = vld [vmem:[%s777 + $0x68] sm:$0xf]
      %v1785 = vld [vmem:[%s777 + $0x6c] sm:$0xf]
      %v1786 = vld [vmem:[%s777 + $0x70] sm:$0xf]
      %v1787 = vld [vmem:[%s777 + $0x74] sm:$0xf]
      %v1788 = vld [vmem:[%s777 + $0x78] sm:$0xf]
      %v1789 = vld [vmem:[%s777 + $0x7c] sm:$0xf]
      %v1822 = vunpack.c.l.b16 %v1758
      %v1823 = vunpack.c.l.b16 %v1759
      %v1824 = vunpack.c.l.b16 %v1760
      %v1825 = vunpack.c.l.b16 %v1761
      %v1826 = vunpack.c.l.b16 %v1762
      %v1827 = vunpack.c.l.b16 %v1763
      %v1828 = vunpack.c.l.b16 %v1764
      %v1829 = vunpack.c.l.b16 %v1765
      %v1830 = vunpack.c.l.b16 %v1766
      %v1831 = vunpack.c.l.b16 %v1767
      %v1832 = vunpack.c.l.b16 %v1768
      %v1833 = vunpack.c.l.b16 %v1769
      %v1834 = vunpack.c.l.b16 %v1770
      %v1835 = vunpack.c.l.b16 %v1771
      %v1836 = vunpack.c.l.b16 %v1772
      %v1837 = vunpack.c.l.b16 %v1773
      %v1838 = vunpack.c.l.b16 %v1774
      %v1839 = vunpack.c.l.b16 %v1775
      %v1840 = vunpack.c.l.b16 %v1776
      %v1841 = vunpack.c.l.b16 %v1777
      %v1842 = vunpack.c.l.b16 %v1778
      %v1843 = vunpack.c.l.b16 %v1779
      %v1844 = vunpack.c.l.b16 %v1780
      %v1845 = vunpack.c.l.b16 %v1781
      %v1846 = vunpack.c.l.b16 %v1782
      %v1847 = vunpack.c.l.b16 %v1783
      %v1848 = vunpack.c.l.b16 %v1784
      %v1849 = vunpack.c.l.b16 %v1785
      %v1850 = vunpack.c.l.b16 %v1786
      %v1851 = vunpack.c.l.b16 %v1787
      %v1852 = vunpack.c.l.b16 %v1788
      %v1853 = vunpack.c.l.b16 %v1789
      %v1854 = vpack.c.b16 %v1823, %v1822
      %v1855 = vpack.c.b16 %v1825, %v1824
      %v1856 = vpack.c.b16 %v1827, %v1826
      %v1857 = vpack.c.b16 %v1829, %v1828
      %v1858 = vpack.c.b16 %v1831, %v1830
      %v1859 = vpack.c.b16 %v1833, %v1832
      %v1860 = vpack.c.b16 %v1835, %v1834
      %v1861 = vpack.c.b16 %v1837, %v1836
      %v1862 = vpack.c.b16 %v1839, %v1838
      %v1863 = vpack.c.b16 %v1841, %v1840
      %v1864 = vpack.c.b16 %v1843, %v1842
      %v1865 = vpack.c.b16 %v1845, %v1844
      %v1866 = vpack.c.b16 %v1847, %v1846
      %v1867 = vpack.c.b16 %v1849, %v1848
      %v1868 = vpack.c.b16 %v1851, %v1850
      %v1869 = vpack.c.b16 %v1853, %v1852
      %1886 = vmatpush.bf16.msra.mxu0 %v1861
      %1887 = vmatpush.bf16.msra.mxu0 %v1860
      %1888 = vmatpush.bf16.msra.mxu0 %v1859
      %1889 = vmatpush.bf16.msra.mxu0 %v1858
      %1890 = vmatpush.bf16.msra.mxu0 %v1857
      %1891 = vmatpush.bf16.msra.mxu0 %v1856
      %1892 = vmatpush.bf16.msra.mxu0 %v1855
      %1893 = vmatpush.bf16.msra.mxu0 %v1854
      %1894 = vmatmul.bf16.gmra.mxu0 %v1756
      %v1895 = vpop.f32.mrf.mxu0
      %v1896 = vadd.f32 0.0, %v1895
      %v1897 = vpop.f32.mrf.mxu0
      %v1898 = vadd.f32 0.0, %v1897
      %1899 = vdwg.mxu0
      %1900 = vmatpush.bf16.msra.mxu0 %v1869
      %1901 = vmatpush.bf16.msra.mxu0 %v1868
      %1902 = vmatpush.bf16.msra.mxu0 %v1867
      %1903 = vmatpush.bf16.msra.mxu0 %v1866
      %1904 = vmatpush.bf16.msra.mxu0 %v1865
      %1905 = vmatpush.bf16.msra.mxu0 %v1864
      %1906 = vmatpush.bf16.msra.mxu0 %v1863
      %1907 = vmatpush.bf16.msra.mxu0 %v1862
      %1908 = vmatmul.bf16.gmra.mxu0 %v1757
      %v1909 = vpop.f32.mrf.mxu0
      %v1910 = vadd.f32 %v1896, %v1909
      %v1911 = vpop.f32.mrf.mxu0
      %v1912 = vadd.f32 %v1898, %v1911
      %1913 = vdwg.mxu0
      %v1914 = vadd.f32 %v1535, %v1910
      %v1915 = vadd.f32 %v1536, %v1912
      %v1916 = vld [vmem:[%s780] sm:$0x1]
      %v1918 = vperm.slane %v1916, 0
      %v1920 = vadd.f32 %v1914, %v1918
      %v1921 = vadd.f32 %v1915, %v1918
      %1922 = vst [vmem:[#allocation2] sm:$0xff] %v1920
      %1923 = vst [vmem:[#allocation2 + $0x8] sm:$0xff] %v1921
      %p1924 = scmp.eq.s32.totalorder %s34, 1
      // Predicated region
      $region97: #{vit_forward.1} parent=91 // pred_check
        %p1925 = pneg %p1924
      $region98: #{vit_forward.1} parent=91 // pred_check_branch
        %1927 = sbr.rel (%p1925) target = $region100
      $region99: #{vit_forward.1} parent=91 // pred_region
        %v1928 = vpack.c.bf16 %v1921, %v1920
        %v1929 = vld [vmem:[%s16] sm:$0xf]
        %v1930 = vld [vmem:[%s16 + $0x4] sm:$0xf]
        %v1931 = vld [vmem:[%s16 + $0x8] sm:$0xf]
        %v1932 = vld [vmem:[%s16 + $0xc] sm:$0xf]
        %v1933 = vld [vmem:[%s16 + $0x10] sm:$0xf]
        %v1934 = vld [vmem:[%s16 + $0x14] sm:$0xf]
        %v1935 = vld [vmem:[%s16 + $0x18] sm:$0xf]
        %v1936 = vld [vmem:[%s16 + $0x1c] sm:$0xf]
        %v1937 = vld [vmem:[%s16 + $0x20] sm:$0xf]
        %v1938 = vld [vmem:[%s16 + $0x24] sm:$0xf]
        %v1939 = vld [vmem:[%s16 + $0x28] sm:$0xf]
        %v1940 = vld [vmem:[%s16 + $0x2c] sm:$0xf]
        %v1941 = vld [vmem:[%s16 + $0x30] sm:$0xf]
        %v1942 = vld [vmem:[%s16 + $0x34] sm:$0xf]
        %v1943 = vld [vmem:[%s16 + $0x38] sm:$0xf]
        %v1944 = vld [vmem:[%s16 + $0x3c] sm:$0xf]
        %v1945 = vld [vmem:[%s17] sm:$0x1]
        %v1947 = vperm.slane %v1945, 0
        %v1965 = vunpack.c.l.b16 %v1929
        %v1966 = vunpack.c.l.b16 %v1930
        %v1967 = vunpack.c.l.b16 %v1931
        %v1968 = vunpack.c.l.b16 %v1932
        %v1969 = vunpack.c.l.b16 %v1933
        %v1970 = vunpack.c.l.b16 %v1934
        %v1971 = vunpack.c.l.b16 %v1935
        %v1972 = vunpack.c.l.b16 %v1936
        %v1973 = vunpack.c.l.b16 %v1937
        %v1974 = vunpack.c.l.b16 %v1938
        %v1975 = vunpack.c.l.b16 %v1939
        %v1976 = vunpack.c.l.b16 %v1940
        %v1977 = vunpack.c.l.b16 %v1941
        %v1978 = vunpack.c.l.b16 %v1942
        %v1979 = vunpack.c.l.b16 %v1943
        %v1980 = vunpack.c.l.b16 %v1944
        %v1981 = vpack.c.b16 %v1966, %v1965
        %v1982 = vpack.c.b16 %v1968, %v1967
        %v1983 = vpack.c.b16 %v1970, %v1969
        %v1984 = vpack.c.b16 %v1972, %v1971
        %v1985 = vpack.c.b16 %v1974, %v1973
        %v1986 = vpack.c.b16 %v1976, %v1975
        %v1987 = vpack.c.b16 %v1978, %v1977
        %v1988 = vpack.c.b16 %v1980, %v1979
        %1997 = vmatpush.bf16.msra.mxu0 %v1988
        %1998 = vmatpush.bf16.msra.mxu0 %v1987
        %1999 = vmatpush.bf16.msra.mxu0 %v1986
        %2000 = vmatpush.bf16.msra.mxu0 %v1985
        %2001 = vmatpush.bf16.msra.mxu0 %v1984
        %2002 = vmatpush.bf16.msra.mxu0 %v1983
        %2003 = vmatpush.bf16.msra.mxu0 %v1982
        %2004 = vmatpush.bf16.msra.mxu0 %v1981
        %2005 = vmatmul.bf16.gmra.mxu0 %v1928
        %v2006 = vpop.f32.mrf.mxu0
        %v2007 = vadd.f32 %v1947, %v2006
        %v2008 = vpop.f32.mrf.mxu0
        %v2009 = vadd.f32 %v1947, %v2008
        %2010 = vdwg.mxu0
        %2011 = vst [vmem:[%s785] sm:$0xff] %v2007
        %2012 = vst [vmem:[%s785 + $0x8] sm:$0xff] %v2009
      $region100: #{vit_forward.1} parent=91 // pred_fallthru
        _
      %p2013 = scmp.lt.s32.totalorder %s33, 1
      %s2014 = scalar_select %p2013, %s33, 1
      %s2015 = smul.addr %s2014, 2
      %s2016 = smul.addr %s2015, 8
      %s2017 = scalar_lea.vmem %s18, %s2016
      // Predicated region
      $region101: #{vit_forward.1} parent=91 // pred_check
        %p2018 = pneg %p502
      $region102: #{vit_forward.1} parent=91 // pred_check_branch
        %2020 = sbr.rel (%p2018) target = $region104
      $region103: #{vit_forward.1} parent=91 // pred_region
        _
      $region104: #{vit_forward.1} parent=91 // pred_fallthru
        _
    $region92: #{vit_forward.1} parent=5 // pred_fallthru
      _
    %p2021 = scmp.le.s32.totalorder 2, %s24
    // Predicated region
    $region105: #{vit_forward.1} parent=5 // pred_check
      %p2022 = pneg %p2021
    $region106: #{vit_forward.1} parent=5 // pred_check_branch
      %2024 = sbr.rel (%p2022) target = $region108
    $region107: #{vit_forward.1} parent=5 // pred_region
      %s2025 = ssub.s32 %s24, 2
      // Predicated region
      $region109: #{vit_forward.1} parent=107 // pred_check
        %p2026 = pneg %p508
      $region110: #{vit_forward.1} parent=107 // pred_check_branch
        %2028 = sbr.rel (%p2026) target = $region112
      $region111: #{vit_forward.1} parent=107 // pred_region
        %p2029 = scmp.lt.s32.totalorder %s35, 1
        %s2030 = scalar_select %p2029, %s35, 1
        %s2031 = smul.addr %s2030, 2
        %s2032 = smul.addr %s2031, 8
        %s2033 = scalar_lea.vmem %s18, %s2032
      $region112: #{vit_forward.1} parent=107 // pred_fallthru
        _
    $region108: #{vit_forward.1} parent=5 // pred_fallthru
      _
  $region6: #{vit_forward.1} parent=0 // loop_footer
    %s28 = sadd.s32 1, %s24
  $region7: #{vit_forward.1} parent=0 // loop_footer_branch
    %23 = sbr.rel target = $region3
  $region8: #{vit_forward.1} parent=0 // loop_exit
    _

</llo_original>
